<compile_context>
chip_gen: v7x
topology: tpu7x:2x2x1
jax: 0.10.0
libtpu: 0.0.40
codegen_flags: <defaults>
</compile_context>

<pallas_src>
import functools

import jax
import jax.numpy as jnp
from jax import lax
from jax.experimental import pallas as pl
from jax.experimental.pallas import tpu as pltpu


def _round_up(v, m):
    return -(-v // m) * m


def _inverted_residual_kernel(x_ref, w1_ref, b1_ref, wdw_ref, b2_ref,
                              w3_ref, b3_ref, out_ref,
                              *, chid_p, W, stride, dilation, use_res):
    # x_ref:   (1, H, in_w_pad)        lane-padded NHWC row slab (f32)
    # w1_ref:  (in_w_pad, t_w_pad)     block-diag expand weights, BN folded,
    #                                  horizontal halo + lane pad built in (bf16)
    # b1_ref:  (1, t_w_pad)            expand bias (halo / pad columns are 0)
    # wdw_ref: (9, W*chid_p)           per-tap per-channel depthwise weights,
    #                                  BN folded, tiled across W (f32)
    # b2_ref:  (1, W*chid_p)
    # w3_ref:  (W*chid_p, out_w_pad)   block-diag project weights, BN folded,
    #                                  stride column-selection folded in (bf16)
    # b3_ref:  (1, out_w_pad)
    # out_ref: (1, Ho, out_w_pad)
    _, H, _ = x_ref.shape
    mid_w = W * chid_p

    x = x_ref[0]                                           # (H, in_w_pad) f32

    # ---- 1x1 expansion conv (+folded BN scale) + bias + ReLU ----
    # bf16 operands -> single MXU pass, f32 accumulation.  Halo / lane-pad
    # columns come out exactly zero (zero weight columns + zero bias).
    t = jnp.dot(x.astype(jnp.bfloat16), w1_ref[...],
                preferred_element_type=jnp.float32)
    t = jnp.maximum(t + b1_ref[...], 0.0)                  # (H, t_w_pad) f32

    # ---- 3x3 depthwise conv, fully in registers ----
    # Horizontal halo already lives in t's column layout; vertical halo via
    # sublane roll (XLU) + row mask -- no concatenated temp.
    row = lax.broadcasted_iota(jnp.int32, (H, 1), 0)
    acc = jnp.zeros((H, mid_w), jnp.float32)
    for kh in range(3):
        dv = (kh - 1) * dilation                           # vertical tap offset
        if dv == 0:
            tv = t
        else:
            # tv[h, :] = t[h + dv, :] for valid rows, 0 outside the image.
            tv = pltpu.roll(t, shift=(-dv) % H, axis=0)
            vmask = jnp.logical_and(row + dv >= 0, row + dv <= H - 1)
            tv = jnp.where(vmask, tv, 0.0)
        for kw in range(3):
            c0 = kw * dilation * chid_p
            win = tv[:, c0:c0 + mid_w]                     # lane-shifted window
            acc = acc + win * wdw_ref[kh * 3 + kw]         # per-channel tap FMA
    acc = jnp.maximum(acc + b2_ref[...], 0.0)              # (H, W*chid_p)

    if stride > 1:
        # Row subsample: single strided sublane slice.  Column subsample is
        # folded into w3 (block-diagonal over every stride-th chid_p block).
        acc = acc[::stride]

    # ---- 1x1 projection conv (+folded BN) + bias (+ residual) ----
    y = jnp.dot(acc.astype(jnp.bfloat16), w3_ref[...],
                preferred_element_type=jnp.float32)
    y = y + b3_ref[...]                                    # (Ho, out_w_pad)
    if use_res:
        y = y + x                                          # same padded layout
    out_ref[0] = y.astype(out_ref.dtype)                   # full-width lane-dense store


def inverted_residual_pallas(x_nchw, p, *, stride, dilation, use_res):
    N, Cin, H, W = x_nchw.shape
    Chid = p["w1"].shape[1]
    Cout = p["w3"].shape[1]
    pad = dilation
    Ho = (H + 2 * pad - 2 * dilation - 1) // stride + 1
    Wo = (W + 2 * pad - 2 * dilation - 1) // stride + 1

    chid_p = _round_up(Chid, 32)              # padded hidden channels
    in_w = W * Cin
    in_w_pad = _round_up(in_w, 128)           # lane-dense input width
    mid_w = W * chid_p                        # full-res depthwise width
    t_w_pad = _round_up((W + 2 * pad) * chid_p, 128)
    out_w = Wo * Cout
    out_w_pad = _round_up(out_w, 128)         # lane-dense output width

    if use_res:
        assert stride == 1 and Cin == Cout and in_w_pad == out_w_pad

    f32, bf16 = jnp.float32, jnp.bfloat16

    # ---- wrapper-side layout plumbing (all XLA, outside the kernel) ----
    # NCHW -> lane-dense, lane-padded (N, H, in_w_pad) slab.
    x_flat = jnp.transpose(x_nchw, (0, 2, 3, 1)).reshape(N, H, in_w)
    x_flat = jnp.pad(x_flat, ((0, 0), (0, 0), (0, in_w_pad - in_w)))

    # Block-diagonal expand weights: input block w -> output block (w + pad);
    # extra input rows / halo + lane-pad output columns stay zero.  bf16.
    w1_big = jnp.zeros((in_w_pad, t_w_pad), f32)
    for w in range(W):
        w1_big = w1_big.at[w * Cin:(w + 1) * Cin,
                           (w + pad) * chid_p:(w + pad) * chid_p + Chid].set(p["w1"])
    w1_big = w1_big.astype(bf16)

    b1_blk = jnp.pad(p["b1"], ((0, 0), (0, chid_p - Chid)))
    b1_f = jnp.zeros((1, t_w_pad), f32)
    b1_f = b1_f.at[:, pad * chid_p:(pad + W) * chid_p].set(jnp.tile(b1_blk, (1, W)))

    wdw_blk = jnp.pad(p["wdw"], ((0, 0), (0, chid_p - Chid)))
    wdw_f = jnp.tile(wdw_blk, (1, W))                      # (9, W*chid_p)

    b2_blk = jnp.pad(p["b2"], ((0, 0), (0, chid_p - Chid)))
    b2_f = jnp.tile(b2_blk, (1, W))                        # (1, W*chid_p)

    # Block-diagonal projection weights; the stride column-subsample is folded
    # in by selecting every stride-th chid_p block.  Output lane-padded.  bf16.
    w3_big = jnp.zeros((mid_w, out_w_pad), f32)
    for wo in range(Wo):
        r0 = (wo * stride) * chid_p
        w3_big = w3_big.at[r0:r0 + Chid, wo * Cout:(wo + 1) * Cout].set(p["w3"])
    w3_big = w3_big.astype(bf16)

    b3_f = jnp.zeros((1, out_w_pad), f32)
    b3_f = b3_f.at[:, :out_w].set(jnp.tile(p["b3"], (1, Wo)))

    kernel = functools.partial(_inverted_residual_kernel,
                               chid_p=chid_p, W=W, stride=stride,
                               dilation=dilation, use_res=use_res)

    grid_spec = pltpu.PrefetchScalarGridSpec(
        num_scalar_prefetch=0,
        grid=(N,),
        in_specs=[
            pl.BlockSpec((1, H, in_w_pad), lambda n: (n, 0, 0)),
            pl.BlockSpec((in_w_pad, t_w_pad), lambda n: (0, 0)),
            pl.BlockSpec((1, t_w_pad), lambda n: (0, 0)),
            pl.BlockSpec((9, mid_w), lambda n: (0, 0)),
            pl.BlockSpec((1, mid_w), lambda n: (0, 0)),
            pl.BlockSpec((mid_w, out_w_pad), lambda n: (0, 0)),
            pl.BlockSpec((1, out_w_pad), lambda n: (0, 0)),
        ],
        out_specs=pl.BlockSpec((1, Ho, out_w_pad), lambda n: (n, 0, 0)),
    )

    out_flat = pl.pallas_call(
        kernel,
        out_shape=jax.ShapeDtypeStruct((N, Ho, out_w_pad), jnp.float32),
        grid_spec=grid_spec,
        compiler_params=pltpu.CompilerParams(dimension_semantics=("parallel",)),
    )(x_flat, w1_big, b1_f, wdw_f, b2_f, w3_big, b3_f)

    # Slice the lane pad off and go back to NCHW.
    out = out_flat[:, :, :out_w].reshape(N, Ho, Wo, Cout)
    return jnp.transpose(out, (0, 3, 1, 2))


def make_params(key, inp, oup, expand_ratio, eps=1e-5):
    """Deterministic synthetic parameters in PyTorch layouts, BN-folded for the kernel."""
    Chid = inp * expand_ratio
    keys = jax.random.split(key, 16)

    # PyTorch-layout conv weights (no bias, as in the module).
    w1_pt = jax.random.normal(keys[0], (Chid, inp, 1, 1), jnp.float32) * 0.1
    wdw_pt = jax.random.normal(keys[1], (Chid, 1, 3, 3), jnp.float32) * 0.1
    w3_pt = jax.random.normal(keys[2], (oup, Chid, 1, 1), jnp.float32) * 0.1

    def bn(kg, kb, km, kv, c):
        gamma = jax.random.uniform(kg, (c,), jnp.float32, 0.5, 1.5)
        beta = jax.random.normal(kb, (c,), jnp.float32) * 0.1
        mean = jax.random.normal(km, (c,), jnp.float32) * 0.1
        var = jax.random.uniform(kv, (c,), jnp.float32, 0.5, 1.5)
        scale = gamma / jnp.sqrt(var + eps)
        bias = beta - mean * scale
        return scale, bias

    s1, b1 = bn(keys[3], keys[4], keys[5], keys[6], Chid)
    s2, b2 = bn(keys[7], keys[8], keys[9], keys[10], Chid)
    s3, b3 = bn(keys[11], keys[12], keys[13], keys[14], oup)

    params = {
        # kernel-side layouts, BN scale folded into the weights
        "w1": jnp.transpose(w1_pt[:, :, 0, 0], (1, 0)) * s1[None, :],   # (Cin, Chid)
        "wdw": (jnp.transpose(wdw_pt[:, 0, :, :], (1, 2, 0)).reshape(9, Chid)
                * s2[None, :]),                                          # (9, Chid)
        "w3": jnp.transpose(w3_pt[:, :, 0, 0], (1, 0)) * s3[None, :],   # (Chid, Cout)
        "b1": b1.reshape(1, -1), "b2": b2.reshape(1, -1), "b3": b3.reshape(1, -1),
        # reference-side layouts (unfolded HWIO + scale/bias)
        "s1": s1.reshape(1, -1), "s2": s2.reshape(1, -1), "s3": s3.reshape(1, -1),
        "w1_hwio": jnp.transpose(w1_pt, (2, 3, 1, 0)),                  # (1,1,Cin,Chid)
        "wdw_hwio": jnp.transpose(wdw_pt, (2, 3, 1, 0)),                # (3,3,1,Chid)
        "w3_hwio": jnp.transpose(w3_pt, (2, 3, 1, 0)),                  # (1,1,Chid,Cout)
    }
    return params


def reference_nhwc(x, p, *, stride, dilation, use_res):
    """Pure-JAX high-precision reference (unfolded weights, HIGHEST precision)."""
    dn = ("NHWC", "HWIO", "NHWC")
    hi = lax.Precision.HIGHEST
    t = lax.conv_general_dilated(x, p["w1_hwio"], (1, 1), "VALID",
                                 dimension_numbers=dn, precision=hi)
    t = jnp.maximum(t * p["s1"] + p["b1"], 0.0)
    t = lax.conv_general_dilated(t, p["wdw_hwio"], (stride, stride),
                                 [(dilation, dilation), (dilation, dilation)],
                                 rhs_dilation=(dilation, dilation),
                                 dimension_numbers=dn,
                                 feature_group_count=t.shape[-1], precision=hi)
    t = jnp.maximum(t * p["s2"] + p["b2"], 0.0)
    y = lax.conv_general_dilated(t, p["w3_hwio"], (1, 1), "VALID",
                                 dimension_numbers=dn, precision=hi)
    y = y * p["s3"] + p["b3"]
    if use_res:
        y = y + x
    return y


if __name__ == "__main__":
    # Module config: InvertedResidual(inp=4, oup=4, stride=1, expand_ratio=6, dilation=1)
    N, inp, oup, H, W = 2, 4, 4, 16, 16
    stride, expand_ratio, dilation = 1, 6, 1
    use_res = (stride == 1) and (inp == oup)

    key = jax.random.PRNGKey(0)
    kx, kp = jax.random.split(key)
    x_nchw = jax.random.normal(kx, (N, inp, H, W), jnp.float32)   # PyTorch layout
    params = make_params(kp, inp, oup, expand_ratio)

    out_nchw = inverted_residual_pallas(x_nchw, params, stride=stride,
                                        dilation=dilation, use_res=use_res)
    jax.block_until_ready(out_nchw)

    # Pure-JAX reference check (kernel uses single-pass bf16 MXU matmuls,
    # reference is HIGHEST precision -> loosened tolerance).
    x_nhwc = jnp.transpose(x_nchw, (0, 2, 3, 1))
    ref_nhwc = reference_nhwc(x_nhwc, params, stride=stride,
                              dilation=dilation, use_res=use_res)
    ref_nchw = jnp.transpose(ref_nhwc, (0, 3, 1, 2))
    assert out_nchw.shape == (N, oup, H, W)
    assert jnp.allclose(out_nchw, ref_nchw, rtol=2e-2, atol=2e-2), (
        float(jnp.max(jnp.abs(out_nchw - ref_nchw))))

    print("KERNEL_OK")
</pallas_src>

<mosaic_0001>
module attributes {stable_mosaic.version = 11 : i64} {
  func.func @_inverted_residual_kernel(%arg0: i32, %arg1: memref<1x16x128xf32, #tpu.memory_space<vmem>>, %arg2: memref<128x640xbf16, #tpu.memory_space<vmem>>, %arg3: memref<1x640xf32, #tpu.memory_space<vmem>>, %arg4: memref<9x512xf32, #tpu.memory_space<vmem>>, %arg5: memref<1x512xf32, #tpu.memory_space<vmem>>, %arg6: memref<512x128xbf16, #tpu.memory_space<vmem>>, %arg7: memref<1x128xf32, #tpu.memory_space<vmem>>, %arg8: memref<1x16x128xf32, #tpu.memory_space<vmem>>) attributes {dimension_semantics = [#tpu.dimension_semantics<parallel>], iteration_bounds = array<i64: 2>, scalar_prefetch = 0 : i64, scratch_operands = 0 : i64, tpu.core_type = #tpu.core_type<tc>, window_params = [{transform_indices = @transform_0, window_bounds = array<i64: 1, 16, 128>}, {pipeline_mode = #tpu.pipeline_mode<synchronous>, transform_indices = @transform_1, window_bounds = array<i64: 128, 640>}, {pipeline_mode = #tpu.pipeline_mode<synchronous>, transform_indices = @transform_2, window_bounds = array<i64: 1, 640>}, {pipeline_mode = #tpu.pipeline_mode<synchronous>, transform_indices = @transform_3, window_bounds = array<i64: 9, 512>}, {pipeline_mode = #tpu.pipeline_mode<synchronous>, transform_indices = @transform_4, window_bounds = array<i64: 1, 512>}, {pipeline_mode = #tpu.pipeline_mode<synchronous>, transform_indices = @transform_5, window_bounds = array<i64: 512, 128>}, {pipeline_mode = #tpu.pipeline_mode<synchronous>, transform_indices = @transform_6, window_bounds = array<i64: 1, 128>}, {transform_indices = @transform_7, window_bounds = array<i64: 1, 16, 128>}]} {
    %c0 = arith.constant 0 : index
    %c0_0 = arith.constant 0 : index
    %c0_1 = arith.constant 0 : index
    %0 = vector.load %arg1[%c0, %c0_0, %c0_1] : memref<1x16x128xf32, #tpu.memory_space<vmem>>, vector<1x16x128xf32>
    %1 = vector.shape_cast %0 : vector<1x16x128xf32> to vector<16x128xf32>
    %2 = arith.truncf %1 : vector<16x128xf32> to vector<16x128xbf16>
    %c0_2 = arith.constant 0 : index
    %c0_3 = arith.constant 0 : index
    %3 = vector.load %arg2[%c0_2, %c0_3] : memref<128x640xbf16, #tpu.memory_space<vmem>>, vector<128x640xbf16>
    %cst = arith.constant dense<0.000000e+00> : vector<16x640xf32>
    %4 = tpu.matmul %2, %3, %cst {dimension_numbers = #tpu.dot_dimension_numbers<[1], [0], [0], [1], [0, 0, 1, 1], [], []>} : vector<16x128xbf16>, vector<128x640xbf16>, vector<16x640xf32> -> vector<16x640xf32>
    %c0_4 = arith.constant 0 : index
    %c0_5 = arith.constant 0 : index
    %5 = vector.load %arg3[%c0_4, %c0_5] : memref<1x640xf32, #tpu.memory_space<vmem>>, vector<1x640xf32>
    %6 = vector.broadcast %5 : vector<1x640xf32> to vector<16x640xf32>
    %7 = arith.addf %4, %6 : vector<16x640xf32>
    %cst_6 = arith.constant 0.000000e+00 : f32
    %8 = vector.broadcast %cst_6 : f32 to vector<16x640xf32>
    %9 = arith.maximumf %7, %8 : vector<16x640xf32>
    %10 = tpu.iota {dimensions = array<i32: 0>} : vector<16x1xi32>
    %cst_7 = arith.constant 0.000000e+00 : f32
    %11 = vector.broadcast %cst_7 : f32 to vector<16x512xf32>
    %c1_i32 = arith.constant 1 : i32
    %12 = tpu.dynamic_rotate %9 by %c1_i32 dim 0 : vector<16x640xf32>, i32 -> vector<16x640xf32>
    %c-1_i32 = arith.constant -1 : i32
    %13 = vector.broadcast %c-1_i32 : i32 to vector<16x1xi32>
    %14 = arith.addi %10, %13 : vector<16x1xi32>
    %c0_i32 = arith.constant 0 : i32
    %15 = vector.broadcast %c0_i32 : i32 to vector<16x1xi32>
    %16 = arith.cmpi sge, %14, %15 : vector<16x1xi32>
    %c-1_i32_8 = arith.constant -1 : i32
    %17 = vector.broadcast %c-1_i32_8 : i32 to vector<16x1xi32>
    %18 = arith.addi %10, %17 : vector<16x1xi32>
    %c15_i32 = arith.constant 15 : i32
    %19 = vector.broadcast %c15_i32 : i32 to vector<16x1xi32>
    %20 = arith.cmpi sle, %18, %19 : vector<16x1xi32>
    %21 = arith.andi %16, %20 : vector<16x1xi1>
    %cst_9 = arith.constant 0.000000e+00 : f32
    %22 = vector.shape_cast %21 : vector<16x1xi1> to vector<16x1xi1>
    %23 = vector.broadcast %22 : vector<16x1xi1> to vector<16x640xi1>
    %24 = vector.broadcast %cst_9 : f32 to vector<16x640xf32>
    %25 = arith.select %23, %12, %24 : vector<16x640xi1>, vector<16x640xf32>
    %26 = vector.extract_strided_slice %25 {offsets = [0, 0], sizes = [16, 512], strides = [1, 1]} : vector<16x640xf32> to vector<16x512xf32>
    %c0_10 = arith.constant 0 : index
    %c0_11 = arith.constant 0 : index
    %27 = vector.load %arg4[%c0_10, %c0_11] : memref<9x512xf32, #tpu.memory_space<vmem>>, vector<1x512xf32>
    %28 = vector.shape_cast %27 : vector<1x512xf32> to vector<512xf32>
    %29 = vector.shape_cast %28 : vector<512xf32> to vector<1x512xf32>
    %30 = vector.broadcast %29 : vector<1x512xf32> to vector<16x512xf32>
    %31 = arith.mulf %26, %30 : vector<16x512xf32>
    %32 = arith.addf %11, %31 : vector<16x512xf32>
    %33 = vector.extract_strided_slice %25 {offsets = [0, 32], sizes = [16, 512], strides = [1, 1]} : vector<16x640xf32> to vector<16x512xf32>
    %c1 = arith.constant 1 : index
    %c0_12 = arith.constant 0 : index
    %34 = vector.load %arg4[%c1, %c0_12] : memref<9x512xf32, #tpu.memory_space<vmem>>, vector<1x512xf32>
    %35 = vector.shape_cast %34 : vector<1x512xf32> to vector<512xf32>
    %36 = vector.shape_cast %35 : vector<512xf32> to vector<1x512xf32>
    %37 = vector.broadcast %36 : vector<1x512xf32> to vector<16x512xf32>
    %38 = arith.mulf %33, %37 : vector<16x512xf32>
    %39 = arith.addf %32, %38 : vector<16x512xf32>
    %40 = vector.extract_strided_slice %25 {offsets = [0, 64], sizes = [16, 512], strides = [1, 1]} : vector<16x640xf32> to vector<16x512xf32>
    %c2 = arith.constant 2 : index
    %c0_13 = arith.constant 0 : index
    %41 = vector.load %arg4[%c2, %c0_13] : memref<9x512xf32, #tpu.memory_space<vmem>>, vector<1x512xf32>
    %42 = vector.shape_cast %41 : vector<1x512xf32> to vector<512xf32>
    %43 = vector.shape_cast %42 : vector<512xf32> to vector<1x512xf32>
    %44 = vector.broadcast %43 : vector<1x512xf32> to vector<16x512xf32>
    %45 = arith.mulf %40, %44 : vector<16x512xf32>
    %46 = arith.addf %39, %45 : vector<16x512xf32>
    %47 = vector.extract_strided_slice %9 {offsets = [0, 0], sizes = [16, 512], strides = [1, 1]} : vector<16x640xf32> to vector<16x512xf32>
    %c3 = arith.constant 3 : index
    %c0_14 = arith.constant 0 : index
    %48 = vector.load %arg4[%c3, %c0_14] : memref<9x512xf32, #tpu.memory_space<vmem>>, vector<1x512xf32>
    %49 = vector.shape_cast %48 : vector<1x512xf32> to vector<512xf32>
    %50 = vector.shape_cast %49 : vector<512xf32> to vector<1x512xf32>
    %51 = vector.broadcast %50 : vector<1x512xf32> to vector<16x512xf32>
    %52 = arith.mulf %47, %51 : vector<16x512xf32>
    %53 = arith.addf %46, %52 : vector<16x512xf32>
    %54 = vector.extract_strided_slice %9 {offsets = [0, 32], sizes = [16, 512], strides = [1, 1]} : vector<16x640xf32> to vector<16x512xf32>
    %c4 = arith.constant 4 : index
    %c0_15 = arith.constant 0 : index
    %55 = vector.load %arg4[%c4, %c0_15] : memref<9x512xf32, #tpu.memory_space<vmem>>, vector<1x512xf32>
    %56 = vector.shape_cast %55 : vector<1x512xf32> to vector<512xf32>
    %57 = vector.shape_cast %56 : vector<512xf32> to vector<1x512xf32>
    %58 = vector.broadcast %57 : vector<1x512xf32> to vector<16x512xf32>
    %59 = arith.mulf %54, %58 : vector<16x512xf32>
    %60 = arith.addf %53, %59 : vector<16x512xf32>
    %61 = vector.extract_strided_slice %9 {offsets = [0, 64], sizes = [16, 512], strides = [1, 1]} : vector<16x640xf32> to vector<16x512xf32>
    %c5 = arith.constant 5 : index
    %c0_16 = arith.constant 0 : index
    %62 = vector.load %arg4[%c5, %c0_16] : memref<9x512xf32, #tpu.memory_space<vmem>>, vector<1x512xf32>
    %63 = vector.shape_cast %62 : vector<1x512xf32> to vector<512xf32>
    %64 = vector.shape_cast %63 : vector<512xf32> to vector<1x512xf32>
    %65 = vector.broadcast %64 : vector<1x512xf32> to vector<16x512xf32>
    %66 = arith.mulf %61, %65 : vector<16x512xf32>
    %67 = arith.addf %60, %66 : vector<16x512xf32>
    %c15_i32_17 = arith.constant 15 : i32
    %68 = tpu.dynamic_rotate %9 by %c15_i32_17 dim 0 : vector<16x640xf32>, i32 -> vector<16x640xf32>
    %c1_i32_18 = arith.constant 1 : i32
    %69 = vector.broadcast %c1_i32_18 : i32 to vector<16x1xi32>
    %70 = arith.addi %10, %69 : vector<16x1xi32>
    %c0_i32_19 = arith.constant 0 : i32
    %71 = vector.broadcast %c0_i32_19 : i32 to vector<16x1xi32>
    %72 = arith.cmpi sge, %70, %71 : vector<16x1xi32>
    %c1_i32_20 = arith.constant 1 : i32
    %73 = vector.broadcast %c1_i32_20 : i32 to vector<16x1xi32>
    %74 = arith.addi %10, %73 : vector<16x1xi32>
    %c15_i32_21 = arith.constant 15 : i32
    %75 = vector.broadcast %c15_i32_21 : i32 to vector<16x1xi32>
    %76 = arith.cmpi sle, %74, %75 : vector<16x1xi32>
    %77 = arith.andi %72, %76 : vector<16x1xi1>
    %cst_22 = arith.constant 0.000000e+00 : f32
    %78 = vector.shape_cast %77 : vector<16x1xi1> to vector<16x1xi1>
    %79 = vector.broadcast %78 : vector<16x1xi1> to vector<16x640xi1>
    %80 = vector.broadcast %cst_22 : f32 to vector<16x640xf32>
    %81 = arith.select %79, %68, %80 : vector<16x640xi1>, vector<16x640xf32>
    %82 = vector.extract_strided_slice %81 {offsets = [0, 0], sizes = [16, 512], strides = [1, 1]} : vector<16x640xf32> to vector<16x512xf32>
    %c6 = arith.constant 6 : index
    %c0_23 = arith.constant 0 : index
    %83 = vector.load %arg4[%c6, %c0_23] : memref<9x512xf32, #tpu.memory_space<vmem>>, vector<1x512xf32>
    %84 = vector.shape_cast %83 : vector<1x512xf32> to vector<512xf32>
    %85 = vector.shape_cast %84 : vector<512xf32> to vector<1x512xf32>
    %86 = vector.broadcast %85 : vector<1x512xf32> to vector<16x512xf32>
    %87 = arith.mulf %82, %86 : vector<16x512xf32>
    %88 = arith.addf %67, %87 : vector<16x512xf32>
    %89 = vector.extract_strided_slice %81 {offsets = [0, 32], sizes = [16, 512], strides = [1, 1]} : vector<16x640xf32> to vector<16x512xf32>
    %c7 = arith.constant 7 : index
    %c0_24 = arith.constant 0 : index
    %90 = vector.load %arg4[%c7, %c0_24] : memref<9x512xf32, #tpu.memory_space<vmem>>, vector<1x512xf32>
    %91 = vector.shape_cast %90 : vector<1x512xf32> to vector<512xf32>
    %92 = vector.shape_cast %91 : vector<512xf32> to vector<1x512xf32>
    %93 = vector.broadcast %92 : vector<1x512xf32> to vector<16x512xf32>
    %94 = arith.mulf %89, %93 : vector<16x512xf32>
    %95 = arith.addf %88, %94 : vector<16x512xf32>
    %96 = vector.extract_strided_slice %81 {offsets = [0, 64], sizes = [16, 512], strides = [1, 1]} : vector<16x640xf32> to vector<16x512xf32>
    %c8 = arith.constant 8 : index
    %c0_25 = arith.constant 0 : index
    %97 = vector.load %arg4[%c8, %c0_25] : memref<9x512xf32, #tpu.memory_space<vmem>>, vector<1x512xf32>
    %98 = vector.shape_cast %97 : vector<1x512xf32> to vector<512xf32>
    %99 = vector.shape_cast %98 : vector<512xf32> to vector<1x512xf32>
    %100 = vector.broadcast %99 : vector<1x512xf32> to vector<16x512xf32>
    %101 = arith.mulf %96, %100 : vector<16x512xf32>
    %102 = arith.addf %95, %101 : vector<16x512xf32>
    %c0_26 = arith.constant 0 : index
    %c0_27 = arith.constant 0 : index
    %103 = vector.load %arg5[%c0_26, %c0_27] : memref<1x512xf32, #tpu.memory_space<vmem>>, vector<1x512xf32>
    %104 = vector.broadcast %103 : vector<1x512xf32> to vector<16x512xf32>
    %105 = arith.addf %102, %104 : vector<16x512xf32>
    %cst_28 = arith.constant 0.000000e+00 : f32
    %106 = vector.broadcast %cst_28 : f32 to vector<16x512xf32>
    %107 = arith.maximumf %105, %106 : vector<16x512xf32>
    %108 = arith.truncf %107 : vector<16x512xf32> to vector<16x512xbf16>
    %c0_29 = arith.constant 0 : index
    %c0_30 = arith.constant 0 : index
    %109 = vector.load %arg6[%c0_29, %c0_30] : memref<512x128xbf16, #tpu.memory_space<vmem>>, vector<512x128xbf16>
    %cst_31 = arith.constant dense<0.000000e+00> : vector<16x128xf32>
    %110 = tpu.matmul %108, %109, %cst_31 {dimension_numbers = #tpu.dot_dimension_numbers<[1], [0], [0], [1], [0, 0, 1, 1], [], []>} : vector<16x512xbf16>, vector<512x128xbf16>, vector<16x128xf32> -> vector<16x128xf32>
    %c0_32 = arith.constant 0 : index
    %c0_33 = arith.constant 0 : index
    %111 = vector.load %arg7[%c0_32, %c0_33] : memref<1x128xf32, #tpu.memory_space<vmem>>, vector<1x128xf32>
    %112 = vector.broadcast %111 : vector<1x128xf32> to vector<16x128xf32>
    %113 = arith.addf %110, %112 : vector<16x128xf32>
    %114 = arith.addf %113, %1 : vector<16x128xf32>
    %c0_34 = arith.constant 0 : index
    %c0_35 = arith.constant 0 : index
    %c0_36 = arith.constant 0 : index
    %115 = vector.load %arg8[%c0_34, %c0_35, %c0_36] : memref<1x16x128xf32, #tpu.memory_space<vmem>>, vector<1x16x128xf32>
    %116 = vector.shape_cast %115 : vector<1x16x128xf32> to vector<16x128xf32>
    %117 = vector.shape_cast %114 : vector<16x128xf32> to vector<1x16x128xf32>
    tpu.vector_store %arg8[%c0_34, %c0_35, %c0_36], %117 {strides = array<i32>} : memref<1x16x128xf32, #tpu.memory_space<vmem>>, vector<1x16x128xf32>,
    return
  }
  func.func @transform_0(%arg0: i32) -> (i32, i32, i32) {
    %c0_i32 = arith.constant 0 : i32
    %c0_i32_0 = arith.constant 0 : i32
    %c0_i32_1 = arith.constant 0 : i32
    return %arg0, %c0_i32, %c0_i32_0 : i32, i32, i32
  }
  func.func @transform_1(%arg0: i32) -> (i32, i32) {
    %c0_i32 = arith.constant 0 : i32
    %c0_i32_0 = arith.constant 0 : i32
    %c0_i32_1 = arith.constant 0 : i32
    return %c0_i32, %c0_i32_0 : i32, i32
  }
  func.func @transform_2(%arg0: i32) -> (i32, i32) {
    %c0_i32 = arith.constant 0 : i32
    %c0_i32_0 = arith.constant 0 : i32
    %c0_i32_1 = arith.constant 0 : i32
    return %c0_i32, %c0_i32_0 : i32, i32
  }
  func.func @transform_3(%arg0: i32) -> (i32, i32) {
    %c0_i32 = arith.constant 0 : i32
    %c0_i32_0 = arith.constant 0 : i32
    %c0_i32_1 = arith.constant 0 : i32
    return %c0_i32, %c0_i32_0 : i32, i32
  }
  func.func @transform_4(%arg0: i32) -> (i32, i32) {
    %c0_i32 = arith.constant 0 : i32
    %c0_i32_0 = arith.constant 0 : i32
    %c0_i32_1 = arith.constant 0 : i32
    return %c0_i32, %c0_i32_0 : i32, i32
  }
  func.func @transform_5(%arg0: i32) -> (i32, i32) {
    %c0_i32 = arith.constant 0 : i32
    %c0_i32_0 = arith.constant 0 : i32
    %c0_i32_1 = arith.constant 0 : i32
    return %c0_i32, %c0_i32_0 : i32, i32
  }
  func.func @transform_6(%arg0: i32) -> (i32, i32) {
    %c0_i32 = arith.constant 0 : i32
    %c0_i32_0 = arith.constant 0 : i32
    %c0_i32_1 = arith.constant 0 : i32
    return %c0_i32, %c0_i32_0 : i32, i32
  }
  func.func @transform_7(%arg0: i32) -> (i32, i32, i32) {
    %c0_i32 = arith.constant 0 : i32
    %c0_i32_0 = arith.constant 0 : i32
    %c0_i32_1 = arith.constant 0 : i32
    return %arg0, %c0_i32, %c0_i32_0 : i32, i32, i32
  }
}

</mosaic_0001>

<llo_original>
// kernel: tpu_custom_call.1
$region0: #{tpu_custom_call.1}
  #allocation0 [shape = 'u32[]', space=smem, size = 0x4, offset = 0x4, fixed_abs, tag = 'smem constant byte address 0x4 - core index']
  #allocation1 [shape = 'u32[144,128]{1,0:T(1,128)}', space=vmem, size = 0x12000, scoped, tag = 'internal scratch']
  %s0 = inlined_call_operand.hbm [shape: f32[2,16,128], index: 0, kind: input, shape index: {}]
  %s1 = inlined_call_operand.hbm [shape: bf16[128,640], index: 1, kind: input, shape index: {}]
  %s2 = inlined_call_operand.vmem [shape: f32[1,640], index: 2, kind: input, shape index: {}]
  %s3 = inlined_call_operand.hbm [shape: f32[9,512], index: 3, kind: input, shape index: {}]
  %s4 = inlined_call_operand.vmem [shape: f32[1,512], index: 4, kind: input, shape index: {}]
  %s5 = inlined_call_operand.hbm [shape: bf16[512,128], index: 5, kind: input, shape index: {}]
  %s6 = inlined_call_operand.vmem [shape: f32[1,128], index: 6, kind: input, shape index: {}]
  %s7 = inlined_call_operand.hbm [shape: f32[2,16,128], index: 7, kind: output, shape index: {}]
  %s8 = sld [smem:[#allocation0]]
  $region77: #{tpu_custom_call.1} parent=0
    _
  %s10 = ssub.s32 1, %s8
  %s11 = scalar_select 0, %s10, %s8
  $region1: #{tpu_custom_call.1} parent=0
    #allocation2 [shape = 'u8[16384]{0}', space=vmem, size = 0x4000, scoped, tag = 'input window, operand 0']
    #allocation3 [shape = 's32[2]{0}', space=sflag, size = 0x8, scoped, tag = 'scoped memory for tpu_custom_call.1']
    #allocation4 [shape = 's32[2]{0}', space=sflag, size = 0x8, scoped, tag = 'scoped memory for tpu_custom_call.1']
    #allocation5 [shape = 'u8[163840]{0}', space=vmem, size = 0x28000, scoped, tag = 'input window, operand 1, single buffered']
    #allocation6 [shape = 's32[1]{0}', space=sflag, size = 0x4, scoped, tag = 'scoped memory for tpu_custom_call.1']
    #allocation7 [shape = 'u8[32768]{0}', space=vmem, size = 0x8000, scoped, tag = 'input window, operand 3, single buffered']
    #allocation8 [shape = 'u8[131072]{0}', space=vmem, size = 0x20000, scoped, tag = 'input window, operand 5, single buffered']
    #allocation9 [shape = 's32[1]{0}', space=sflag, size = 0x4, scoped, tag = 'scoped memory for tpu_custom_call.1']
    #allocation10 [shape = 'u8[16384]{0}', space=vmem, size = 0x4000, scoped, tag = 'output window, operand 0']
    %12 = vsyncpa [#allocation3], 0
    %s13 = scalar_lea.sflag [#allocation3], 1
    %14 = vsyncpa %s13, 0
    %15 = vsyncpa [#allocation6], 0
    %16 = vsyncpa [#allocation9], 0
    %17 = vsyncpa [#allocation4], 0
    %s18 = scalar_lea.sflag [#allocation4], 1
    %19 = vsyncpa %s18, 0
    loop: start=0, step=1, limit=4
    $region2: #{tpu_custom_call.1} parent=1 // loop_pre_header
      _
    $region3: #{tpu_custom_call.1} parent=1 // loop_header
      %s21 = sphi 0, %s25
      %p22 = scmp.ge.s32.totalorder %s21, 4
      %s31 = sphi 0, %s33
      %s34 = sphi 0, %s31
      %s35 = sphi 0, %s34
      %s51 = sphi 0, %s35
      %s55 = sphi 0, %s55
      %s57 = sphi 0, %s55
      %s58 = sphi 0, %s57
      %s72 = sphi 0, %s58
      %s76 = sphi 0, %s76
      %s78 = sphi 0, %s76
      %s79 = sphi 0, %s78
      %s93 = sphi 0, %s79
      %s97 = sphi 0, %s97
      %s99 = sphi 0, %s97
      %s100 = sphi 0, %s99
      %s114 = sphi 0, %s100
      %s118 = sphi 0, %s118
      %s120 = sphi 0, %s118
      %s121 = sphi 0, %s120
      %s135 = sphi 0, %s121
      %s139 = sphi 0, %s139
      %s141 = sphi 0, %s139
      %s142 = sphi 0, %s141
      %s156 = sphi 0, %s142
      %s160 = sphi 0, %s160
      %s162 = sphi 0, %s160
      %s163 = sphi 0, %s162
      %s177 = sphi 0, %s163
      %s183 = sphi 0, %s185
      %s186 = sphi 0, %s183
      %s187 = sphi 0, %s186
      %s203 = sphi 0, %s187
    $region4: #{tpu_custom_call.1} parent=1 // loop_header_branch
      %24 = sbr.rel (%p22) target = $region8
    $region5: #{tpu_custom_call.1} parent=1 // loop_body
      %s26 = ssub.s32 %s21, 1
      %s27 = ssub.s32 %s21, 2
      %s28 = sadd.s32 %s21, 1
      %s29 = ssub.s32 %s21, %s28
      %p30 = scmp.eq.s32.totalorder %s29, 0
      %s32 = sadd.s32 %s31, 1
      %s33 = scalar_select %p30, %s31, %s32
      %p36 = pneg %p30
      %p37 = scmp.eq.s32.totalorder %s21, 1
      %p38 = por %p36, %p37
      %p39 = scmp.ne.s32.totalorder %s31, %s34
      %p40 = scmp.eq.s32.totalorder %s21, 0
      %p41 = por %p39, %p40
      %p42 = scmp.ne.s32.totalorder %s31, %s34
      %p43 = scmp.eq.s32.totalorder %s26, 1
      %p44 = por %p42, %p43
      %p45 = scmp.ne.s32.totalorder %s34, %s35
      %p46 = scmp.eq.s32.totalorder %s26, 0
      %p47 = por %p45, %p46
      %p48 = scmp.ne.s32.totalorder %s34, %s35
      %p49 = scmp.eq.s32.totalorder %s27, 1
      %p50 = por %p48, %p49
      %p52 = scmp.ne.s32.totalorder %s35, %s51
      %p53 = scmp.eq.s32.totalorder %s27, 0
      %p54 = por %p52, %p53
      %s56 = sadd.s32 %s55, 1
      %p59 = scmp.eq.s32.totalorder %s21, 1
      %p60 = scmp.ne.s32.totalorder %s55, %s57
      %p61 = scmp.eq.s32.totalorder %s21, 0
      %p62 = por %p60, %p61
      %p63 = scmp.ne.s32.totalorder %s55, %s57
      %p64 = scmp.eq.s32.totalorder %s26, 1
      %p65 = por %p63, %p64
      %p66 = scmp.ne.s32.totalorder %s57, %s58
      %p67 = scmp.eq.s32.totalorder %s26, 0
      %p68 = por %p66, %p67
      %p69 = scmp.ne.s32.totalorder %s57, %s58
      %p70 = scmp.eq.s32.totalorder %s27, 1
      %p71 = por %p69, %p70
      %p73 = scmp.ne.s32.totalorder %s58, %s72
      %p74 = scmp.eq.s32.totalorder %s27, 0
      %p75 = por %p73, %p74
      %s77 = sadd.s32 %s76, 1
      %p80 = scmp.eq.s32.totalorder %s21, 1
      %p81 = scmp.ne.s32.totalorder %s76, %s78
      %p82 = scmp.eq.s32.totalorder %s21, 0
      %p83 = por %p81, %p82
      %p84 = scmp.ne.s32.totalorder %s76, %s78
      %p85 = scmp.eq.s32.totalorder %s26, 1
      %p86 = por %p84, %p85
      %p87 = scmp.ne.s32.totalorder %s78, %s79
      %p88 = scmp.eq.s32.totalorder %s26, 0
      %p89 = por %p87, %p88
      %p90 = scmp.ne.s32.totalorder %s78, %s79
      %p91 = scmp.eq.s32.totalorder %s27, 1
      %p92 = por %p90, %p91
      %p94 = scmp.ne.s32.totalorder %s79, %s93
      %p95 = scmp.eq.s32.totalorder %s27, 0
      %p96 = por %p94, %p95
      %s98 = sadd.s32 %s97, 1
      %p101 = scmp.eq.s32.totalorder %s21, 1
      %p102 = scmp.ne.s32.totalorder %s97, %s99
      %p103 = scmp.eq.s32.totalorder %s21, 0
      %p104 = por %p102, %p103
      %p105 = scmp.ne.s32.totalorder %s97, %s99
      %p106 = scmp.eq.s32.totalorder %s26, 1
      %p107 = por %p105, %p106
      %p108 = scmp.ne.s32.totalorder %s99, %s100
      %p109 = scmp.eq.s32.totalorder %s26, 0
      %p110 = por %p108, %p109
      %p111 = scmp.ne.s32.totalorder %s99, %s100
      %p112 = scmp.eq.s32.totalorder %s27, 1
      %p113 = por %p111, %p112
      %p115 = scmp.ne.s32.totalorder %s100, %s114
      %p116 = scmp.eq.s32.totalorder %s27, 0
      %p117 = por %p115, %p116
      %s119 = sadd.s32 %s118, 1
      %p122 = scmp.eq.s32.totalorder %s21, 1
      %p123 = scmp.ne.s32.totalorder %s118, %s120
      %p124 = scmp.eq.s32.totalorder %s21, 0
      %p125 = por %p123, %p124
      %p126 = scmp.ne.s32.totalorder %s118, %s120
      %p127 = scmp.eq.s32.totalorder %s26, 1
      %p128 = por %p126, %p127
      %p129 = scmp.ne.s32.totalorder %s120, %s121
      %p130 = scmp.eq.s32.totalorder %s26, 0
      %p131 = por %p129, %p130
      %p132 = scmp.ne.s32.totalorder %s120, %s121
      %p133 = scmp.eq.s32.totalorder %s27, 1
      %p134 = por %p132, %p133
      %p136 = scmp.ne.s32.totalorder %s121, %s135
      %p137 = scmp.eq.s32.totalorder %s27, 0
      %p138 = por %p136, %p137
      %s140 = sadd.s32 %s139, 1
      %p143 = scmp.eq.s32.totalorder %s21, 1
      %p144 = scmp.ne.s32.totalorder %s139, %s141
      %p145 = scmp.eq.s32.totalorder %s21, 0
      %p146 = por %p144, %p145
      %p147 = scmp.ne.s32.totalorder %s139, %s141
      %p148 = scmp.eq.s32.totalorder %s26, 1
      %p149 = por %p147, %p148
      %p150 = scmp.ne.s32.totalorder %s141, %s142
      %p151 = scmp.eq.s32.totalorder %s26, 0
      %p152 = por %p150, %p151
      %p153 = scmp.ne.s32.totalorder %s141, %s142
      %p154 = scmp.eq.s32.totalorder %s27, 1
      %p155 = por %p153, %p154
      %p157 = scmp.ne.s32.totalorder %s142, %s156
      %p158 = scmp.eq.s32.totalorder %s27, 0
      %p159 = por %p157, %p158
      %s161 = sadd.s32 %s160, 1
      %p164 = scmp.eq.s32.totalorder %s21, 1
      %p165 = scmp.ne.s32.totalorder %s160, %s162
      %p166 = scmp.eq.s32.totalorder %s21, 0
      %p167 = por %p165, %p166
      %p168 = scmp.ne.s32.totalorder %s160, %s162
      %p169 = scmp.eq.s32.totalorder %s26, 1
      %p170 = por %p168, %p169
      %p171 = scmp.ne.s32.totalorder %s162, %s163
      %p172 = scmp.eq.s32.totalorder %s26, 0
      %p173 = por %p171, %p172
      %p174 = scmp.ne.s32.totalorder %s162, %s163
      %p175 = scmp.eq.s32.totalorder %s27, 1
      %p176 = por %p174, %p175
      %p178 = scmp.ne.s32.totalorder %s163, %s177
      %p179 = scmp.eq.s32.totalorder %s27, 0
      %p180 = por %p178, %p179
      %s181 = ssub.s32 %s21, %s28
      %p182 = scmp.eq.s32.totalorder %s181, 0
      %s184 = sadd.s32 %s183, 1
      %s185 = scalar_select %p182, %s183, %s184
      %p188 = pneg %p182
      %p189 = scmp.eq.s32.totalorder %s21, 1
      %p190 = por %p188, %p189
      %p191 = scmp.ne.s32.totalorder %s183, %s186
      %p192 = scmp.eq.s32.totalorder %s21, 0
      %p193 = por %p191, %p192
      %p194 = scmp.ne.s32.totalorder %s183, %s186
      %p195 = scmp.eq.s32.totalorder %s26, 1
      %p196 = por %p194, %p195
      %p197 = scmp.ne.s32.totalorder %s186, %s187
      %p198 = scmp.eq.s32.totalorder %s26, 0
      %p199 = por %p197, %p198
      %p200 = scmp.ne.s32.totalorder %s186, %s187
      %p201 = scmp.eq.s32.totalorder %s27, 1
      %p202 = por %p200, %p201
      %p204 = scmp.ne.s32.totalorder %s187, %s203
      %p205 = scmp.eq.s32.totalorder %s27, 0
      %p206 = por %p204, %p205
      %p207 = scmp.le.s32.totalorder 1, %s21
      %p208 = scmp.lt.s32.totalorder %s21, 3
      %p209 = pnand %p207, %p208
      %p210 = pneg %p209
      // Predicated region
      $region9: #{tpu_custom_call.1} parent=5 // pred_check
        _
      $region10: #{tpu_custom_call.1} parent=5 // pred_check_branch
        %212 = sbr.rel (%p209) target = $region12
      $region11: #{tpu_custom_call.1} parent=5 // pred_region
        %s213 = ssub.s32 %s21, 1
        // Predicated region
        $region13: #{tpu_custom_call.1} parent=11 // pred_check
          %p214 = pneg %p68
        $region14: #{tpu_custom_call.1} parent=11 // pred_check_branch
          %216 = sbr.rel (%p214) target = $region16
        $region15: #{tpu_custom_call.1} parent=11 // pred_region
          %s218 = ssub.s32 5120, 5120
          %219 = vsyncadd [#allocation6], %s218
          %s220 = sshll.u32 [#allocation5], 4
          %s221 = int_to_ptr.vmem [resolvable:$true] %s220
          %226 = dma.hbm_to_vmem [thread:$0]  %s1, 5120, %s221, [#allocation6], 320, 320, 20
        $region16: #{tpu_custom_call.1} parent=11 // pred_fallthru
          _
        // Predicated region
        $region17: #{tpu_custom_call.1} parent=11 // pred_check
          %p227 = pneg %p89
        $region18: #{tpu_custom_call.1} parent=11 // pred_check_branch
          %229 = sbr.rel (%p227) target = $region20
        $region19: #{tpu_custom_call.1} parent=11 // pred_region
          _
        $region20: #{tpu_custom_call.1} parent=11 // pred_fallthru
          _
        // Predicated region
        $region21: #{tpu_custom_call.1} parent=11 // pred_check
          %p230 = pneg %p110
        $region22: #{tpu_custom_call.1} parent=11 // pred_check_branch
          %232 = sbr.rel (%p230) target = $region24
        $region23: #{tpu_custom_call.1} parent=11 // pred_region
          %s234 = ssub.s32 1024, 1024
          %235 = vsyncadd [#allocation6], %s234
          %s236 = sshll.u32 [#allocation7], 4
          %s237 = int_to_ptr.vmem [resolvable:$true] %s236
          %242 = dma.hbm_to_vmem [thread:$0]  %s3, 1024, %s237, [#allocation6], 512, 512, 32
        $region24: #{tpu_custom_call.1} parent=11 // pred_fallthru
          _
        // Predicated region
        $region25: #{tpu_custom_call.1} parent=11 // pred_check
          %p243 = pneg %p131
        $region26: #{tpu_custom_call.1} parent=11 // pred_check_branch
          %245 = sbr.rel (%p243) target = $region28
        $region27: #{tpu_custom_call.1} parent=11 // pred_region
          _
        $region28: #{tpu_custom_call.1} parent=11 // pred_fallthru
          _
        // Predicated region
        $region29: #{tpu_custom_call.1} parent=11 // pred_check
          %p246 = pneg %p152
        $region30: #{tpu_custom_call.1} parent=11 // pred_check_branch
          %248 = sbr.rel (%p246) target = $region32
        $region31: #{tpu_custom_call.1} parent=11 // pred_region
          %s250 = ssub.s32 4096, 4096
          %251 = vsyncadd [#allocation9], %s250
          %s252 = sshll.u32 [#allocation8], 4
          %s253 = int_to_ptr.vmem [resolvable:$true] %s252
          %258 = dma.hbm_to_vmem [thread:$0]  %s5, 4096, %s253, [#allocation9], 64, 64, 4
        $region32: #{tpu_custom_call.1} parent=11 // pred_fallthru
          _
        // Predicated region
        $region33: #{tpu_custom_call.1} parent=11 // pred_check
          %p259 = pneg %p173
        $region34: #{tpu_custom_call.1} parent=11 // pred_check_branch
          %261 = sbr.rel (%p259) target = $region36
        $region35: #{tpu_custom_call.1} parent=11 // pred_region
          _
        $region36: #{tpu_custom_call.1} parent=11 // pred_fallthru
          _
      $region12: #{tpu_custom_call.1} parent=5 // pred_fallthru
        _
      %p262 = scmp.lt.s32.totalorder %s21, 2
      // Predicated region
      $region37: #{tpu_custom_call.1} parent=5 // pred_check
        %p263 = pneg %p262
      $region38: #{tpu_custom_call.1} parent=5 // pred_check_branch
        %265 = sbr.rel (%p263) target = $region40
      $region39: #{tpu_custom_call.1} parent=5 // pred_region
        // Predicated region
        $region41: #{tpu_custom_call.1} parent=39 // pred_check
          %p266 = pneg %p41
        $region42: #{tpu_custom_call.1} parent=39 // pred_check_branch
          %268 = sbr.rel (%p266) target = $region44
        $region43: #{tpu_custom_call.1} parent=39 // pred_region
          %s269 = sand.u32 %s31, 1
          %s270 = scalar_lea.sflag [#allocation3], %s269
          %s271 = sand.u32 %s31, 1
          %s272 = smul.addr %s271, 16
          %s273 = scalar_lea.vmem [#allocation2], %s272
          %s275 = ssub.s32 256, 256
          %276 = vsyncadd %s270, %s275
          %s277 = smul.addr %s21, 2
          %s278 = smul.addr %s277, 128
          %s279 = scalar_lea.hbm %s0, %s278
          %s280 = sshll.u32 %s273, 4
          %s281 = int_to_ptr.vmem [resolvable:$true] %s280
          %286 = dma.hbm_to_vmem [thread:$0]  %s279, 256, %s281, %s270, 128, 128, 8
        $region44: #{tpu_custom_call.1} parent=39 // pred_fallthru
          _
      $region40: #{tpu_custom_call.1} parent=5 // pred_fallthru
        _
      %p287 = scmp.le.s32.totalorder 1, %s21
      %p288 = scmp.lt.s32.totalorder %s21, 3
      %p289 = pnand %p287, %p288
      %p290 = pneg %p289
      // Predicated region
      $region45: #{tpu_custom_call.1} parent=5 // pred_check
        _
      $region46: #{tpu_custom_call.1} parent=5 // pred_check_branch
        %292 = sbr.rel (%p289) target = $region48
      $region47: #{tpu_custom_call.1} parent=5 // pred_region
        %s293 = ssub.s32 %s21, 1
        %s294 = sand.u32 %s34, 1
        %s295 = scalar_lea.sflag [#allocation3], %s294
        %s296 = sand.u32 %s34, 1
        %s297 = smul.addr %s296, 16
        %s298 = scalar_lea.vmem [#allocation2], %s297
        // Predicated region
        $region49: #{tpu_custom_call.1} parent=47 // pred_check
          %p299 = pneg %p47
        $region50: #{tpu_custom_call.1} parent=47 // pred_check_branch
          %301 = sbr.rel (%p299) target = $region52
        $region51: #{tpu_custom_call.1} parent=47 // pred_region
          %302 = dma.done %s295, 256
        $region52: #{tpu_custom_call.1} parent=47 // pred_fallthru
          _
        // Predicated region
        $region53: #{tpu_custom_call.1} parent=47 // pred_check
          %p303 = pneg %p68
        $region54: #{tpu_custom_call.1} parent=47 // pred_check_branch
          %305 = sbr.rel (%p303) target = $region56
        $region55: #{tpu_custom_call.1} parent=47 // pred_region
          %306 = dma.done [#allocation6], 5120
        $region56: #{tpu_custom_call.1} parent=47 // pred_fallthru
          _
        // Predicated region
        $region57: #{tpu_custom_call.1} parent=47 // pred_check
          %p307 = pneg %p110
        $region58: #{tpu_custom_call.1} parent=47 // pred_check_branch
          %309 = sbr.rel (%p307) target = $region60
        $region59: #{tpu_custom_call.1} parent=47 // pred_region
          %310 = dma.done [#allocation6], 1024
        $region60: #{tpu_custom_call.1} parent=47 // pred_fallthru
          _
        // Predicated region
        $region61: #{tpu_custom_call.1} parent=47 // pred_check
          %p311 = pneg %p152
        $region62: #{tpu_custom_call.1} parent=47 // pred_check_branch
          %313 = sbr.rel (%p311) target = $region64
        $region63: #{tpu_custom_call.1} parent=47 // pred_region
          %314 = dma.done [#allocation9], 4096
        $region64: #{tpu_custom_call.1} parent=47 // pred_fallthru
          _
        %s315 = sand.u32 %s34, 1
        %s316 = scalar_lea.sflag [#allocation3], %s315
        %s317 = sand.u32 %s34, 1
        %s318 = smul.addr %s317, 16
        %s319 = scalar_lea.vmem [#allocation2], %s318
        %p320 = pneg %p47
        %p321 = pneg %p44
        %p322 = pneg %p68
        %p323 = pneg %p65
        %p324 = pneg %p89
        %p325 = pneg %p86
        %p326 = pneg %p110
        %p327 = pneg %p107
        %p328 = pneg %p131
        %p329 = pneg %p128
        %p330 = pneg %p152
        %p331 = pneg %p149
        %p332 = pneg %p173
        %p333 = pneg %p170
        %p334 = pneg %p199
        %p335 = pneg %p196
        %s336 = sand.u32 %s186, 1
        %s337 = scalar_lea.sflag [#allocation4], %s336
        %s338 = sand.u32 %s186, 1
        %s339 = smul.addr %s338, 16
        %s340 = scalar_lea.vmem [#allocation10], %s339
        %v342 = vld [vmem:[%s298] sm:$0xff]
        %v343 = vld [vmem:[%s298 + $0x8] sm:$0xff]
        %v344 = vpack.c.bf16 %v343, %v342
        %v345 = vld [vmem:[#allocation5] sm:$0xff]
        %v346 = vld [vmem:[#allocation5 + $0x8] sm:$0xff]
        %v347 = vld [vmem:[#allocation5 + $0x10] sm:$0xf]
        %v348 = vld [vmem:[#allocation5 + $0x14] sm:$0xff]
        %v349 = vld [vmem:[#allocation5 + $0x1c] sm:$0xff]
        %v350 = vld [vmem:[#allocation5 + $0x24] sm:$0xf]
        %v351 = vld [vmem:[#allocation5 + $0x28] sm:$0xff]
        %v352 = vld [vmem:[#allocation5 + $0x30] sm:$0xff]
        %v353 = vld [vmem:[#allocation5 + $0x38] sm:$0xf]
        %v354 = vld [vmem:[#allocation5 + $0x3c] sm:$0xff]
        %v355 = vld [vmem:[#allocation5 + $0x44] sm:$0xff]
        %v356 = vld [vmem:[#allocation5 + $0x4c] sm:$0xf]
        %v357 = vld [vmem:[#allocation5 + $0x50] sm:$0xff]
        %v358 = vld [vmem:[#allocation5 + $0x58] sm:$0xff]
        %v359 = vld [vmem:[#allocation5 + $0x60] sm:$0xf]
        %v360 = vld [vmem:[#allocation5 + $0x64] sm:$0xff]
        %v361 = vld [vmem:[#allocation5 + $0x6c] sm:$0xff]
        %v362 = vld [vmem:[#allocation5 + $0x74] sm:$0xf]
        %v363 = vld [vmem:[#allocation5 + $0x78] sm:$0xff]
        %v364 = vld [vmem:[#allocation5 + $0x80] sm:$0xff]
        %v365 = vld [vmem:[#allocation5 + $0x88] sm:$0xf]
        %v366 = vld [vmem:[#allocation5 + $0x8c] sm:$0xff]
        %v367 = vld [vmem:[#allocation5 + $0x94] sm:$0xff]
        %v368 = vld [vmem:[#allocation5 + $0x9c] sm:$0xf]
        %v369 = vld [vmem:[#allocation5 + $0xa0] sm:$0xff]
        %v370 = vld [vmem:[#allocation5 + $0xa8] sm:$0xff]
        %v371 = vld [vmem:[#allocation5 + $0xb0] sm:$0xf]
        %v372 = vld [vmem:[#allocation5 + $0xb4] sm:$0xff]
        %v373 = vld [vmem:[#allocation5 + $0xbc] sm:$0xff]
        %v374 = vld [vmem:[#allocation5 + $0xc4] sm:$0xf]
        %v375 = vld [vmem:[#allocation5 + $0xc8] sm:$0xff]
        %v376 = vld [vmem:[#allocation5 + $0xd0] sm:$0xff]
        %v377 = vld [vmem:[#allocation5 + $0xd8] sm:$0xf]
        %v378 = vld [vmem:[#allocation5 + $0xdc] sm:$0xff]
        %v379 = vld [vmem:[#allocation5 + $0xe4] sm:$0xff]
        %v380 = vld [vmem:[#allocation5 + $0xec] sm:$0xf]
        %v381 = vld [vmem:[#allocation5 + $0xf0] sm:$0xff]
        %v382 = vld [vmem:[#allocation5 + $0xf8] sm:$0xff]
        %v383 = vld [vmem:[#allocation5 + $0x100] sm:$0xf]
        %v384 = vld [vmem:[#allocation5 + $0x104] sm:$0xff]
        %v385 = vld [vmem:[#allocation5 + $0x10c] sm:$0xff]
        %v386 = vld [vmem:[#allocation5 + $0x114] sm:$0xf]
        %v387 = vld [vmem:[#allocation5 + $0x118] sm:$0xff]
        %v388 = vld [vmem:[#allocation5 + $0x120] sm:$0xff]
        %v389 = vld [vmem:[#allocation5 + $0x128] sm:$0xf]
        %v390 = vld [vmem:[#allocation5 + $0x12c] sm:$0xff]
        %v391 = vld [vmem:[#allocation5 + $0x134] sm:$0xff]
        %v392 = vld [vmem:[#allocation5 + $0x13c] sm:$0xf]
        %v393 = vld [vmem:[%s2] sm:$0x1f]
        %v395 = vlaneseq
        %v396 = vshrl.u32 %v395, 7
        %v397 = vsub.s32 0, %v396
        %v398 = vrot.slane %v393, %v397
        %v399 = vlaneseq
        %v400 = vshrl.u32 %v399, 7
        %v401 = vsub.s32 1, %v400
        %v402 = vrot.slane %v393, %v401
        %v403 = vlaneseq
        %v404 = vshrl.u32 %v403, 7
        %v405 = vsub.s32 2, %v404
        %v406 = vrot.slane %v393, %v405
        %v407 = vlaneseq
        %v408 = vshrl.u32 %v407, 7
        %v409 = vsub.s32 3, %v408
        %v410 = vrot.slane %v393, %v409
        %v411 = vlaneseq
        %v412 = vshrl.u32 %v411, 7
        %v413 = vsub.s32 4, %v412
        %v414 = vrot.slane %v393, %v413
        %v468 = vunpack.c.l.b16 %v345
        %v469 = vunpack.c.h.b16 %v345
        %v470 = vunpack.c.l.b16 %v346
        %v471 = vunpack.c.h.b16 %v346
        %v472 = vunpack.c.l.b16 %v347
        %v473 = vunpack.c.l.b16 %v348
        %v474 = vunpack.c.h.b16 %v348
        %v475 = vunpack.c.l.b16 %v349
        %v476 = vunpack.c.h.b16 %v349
        %v477 = vunpack.c.l.b16 %v350
        %v478 = vunpack.c.l.b16 %v351
        %v479 = vunpack.c.h.b16 %v351
        %v480 = vunpack.c.l.b16 %v352
        %v481 = vunpack.c.h.b16 %v352
        %v482 = vunpack.c.l.b16 %v353
        %v483 = vunpack.c.l.b16 %v354
        %v484 = vunpack.c.h.b16 %v354
        %v485 = vunpack.c.l.b16 %v355
        %v486 = vunpack.c.h.b16 %v355
        %v487 = vunpack.c.l.b16 %v356
        %v488 = vunpack.c.l.b16 %v357
        %v489 = vunpack.c.h.b16 %v357
        %v490 = vunpack.c.l.b16 %v358
        %v491 = vunpack.c.h.b16 %v358
        %v492 = vunpack.c.l.b16 %v359
        %v493 = vunpack.c.l.b16 %v360
        %v494 = vunpack.c.h.b16 %v360
        %v495 = vunpack.c.l.b16 %v361
        %v496 = vunpack.c.h.b16 %v361
        %v497 = vunpack.c.l.b16 %v362
        %v498 = vunpack.c.l.b16 %v363
        %v499 = vunpack.c.h.b16 %v363
        %v500 = vunpack.c.l.b16 %v364
        %v501 = vunpack.c.h.b16 %v364
        %v502 = vunpack.c.l.b16 %v365
        %v503 = vunpack.c.l.b16 %v366
        %v504 = vunpack.c.h.b16 %v366
        %v505 = vunpack.c.l.b16 %v367
        %v506 = vunpack.c.h.b16 %v367
        %v507 = vunpack.c.l.b16 %v368
        %v508 = vunpack.c.l.b16 %v369
        %v509 = vunpack.c.h.b16 %v369
        %v510 = vunpack.c.l.b16 %v370
        %v511 = vunpack.c.h.b16 %v370
        %v512 = vunpack.c.l.b16 %v371
        %v513 = vunpack.c.l.b16 %v372
        %v514 = vunpack.c.h.b16 %v372
        %v515 = vunpack.c.l.b16 %v373
        %v516 = vunpack.c.h.b16 %v373
        %v517 = vunpack.c.l.b16 %v374
        %v518 = vunpack.c.l.b16 %v375
        %v519 = vunpack.c.h.b16 %v375
        %v520 = vunpack.c.l.b16 %v376
        %v521 = vunpack.c.h.b16 %v376
        %v522 = vunpack.c.l.b16 %v377
        %v523 = vunpack.c.l.b16 %v378
        %v524 = vunpack.c.h.b16 %v378
        %v525 = vunpack.c.l.b16 %v379
        %v526 = vunpack.c.h.b16 %v379
        %v527 = vunpack.c.l.b16 %v380
        %v528 = vunpack.c.l.b16 %v381
        %v529 = vunpack.c.h.b16 %v381
        %v530 = vunpack.c.l.b16 %v382
        %v531 = vunpack.c.h.b16 %v382
        %v532 = vunpack.c.l.b16 %v383
        %v533 = vunpack.c.l.b16 %v384
        %v534 = vunpack.c.h.b16 %v384
        %v535 = vunpack.c.l.b16 %v385
        %v536 = vunpack.c.h.b16 %v385
        %v537 = vunpack.c.l.b16 %v386
        %v538 = vunpack.c.l.b16 %v387
        %v539 = vunpack.c.h.b16 %v387
        %v540 = vunpack.c.l.b16 %v388
        %v541 = vunpack.c.h.b16 %v388
        %v542 = vunpack.c.l.b16 %v389
        %v543 = vunpack.c.l.b16 %v390
        %v544 = vunpack.c.h.b16 %v390
        %v545 = vunpack.c.l.b16 %v391
        %v546 = vunpack.c.h.b16 %v391
        %v547 = vunpack.c.l.b16 %v392
        %v548 = vpack.c.b16 %v473, %v468
        %v549 = vpack.c.b16 %v474, %v469
        %v550 = vpack.c.b16 %v475, %v470
        %v551 = vpack.c.b16 %v476, %v471
        %v552 = vpack.c.b16 %v477, %v472
        %v553 = vpack.c.b16 %v483, %v478
        %v554 = vpack.c.b16 %v484, %v479
        %v555 = vpack.c.b16 %v485, %v480
        %v556 = vpack.c.b16 %v486, %v481
        %v557 = vpack.c.b16 %v487, %v482
        %v558 = vpack.c.b16 %v493, %v488
        %v559 = vpack.c.b16 %v494, %v489
        %v560 = vpack.c.b16 %v495, %v490
        %v561 = vpack.c.b16 %v496, %v491
        %v562 = vpack.c.b16 %v497, %v492
        %v563 = vpack.c.b16 %v503, %v498
        %v564 = vpack.c.b16 %v504, %v499
        %v565 = vpack.c.b16 %v505, %v500
        %v566 = vpack.c.b16 %v506, %v501
        %v567 = vpack.c.b16 %v507, %v502
        %v568 = vpack.c.b16 %v513, %v508
        %v569 = vpack.c.b16 %v514, %v509
        %v570 = vpack.c.b16 %v515, %v510
        %v571 = vpack.c.b16 %v516, %v511
        %v572 = vpack.c.b16 %v517, %v512
        %v573 = vpack.c.b16 %v523, %v518
        %v574 = vpack.c.b16 %v524, %v519
        %v575 = vpack.c.b16 %v525, %v520
        %v576 = vpack.c.b16 %v526, %v521
        %v577 = vpack.c.b16 %v527, %v522
        %v578 = vpack.c.b16 %v533, %v528
        %v579 = vpack.c.b16 %v534, %v529
        %v580 = vpack.c.b16 %v535, %v530
        %v581 = vpack.c.b16 %v536, %v531
        %v582 = vpack.c.b16 %v537, %v532
        %v583 = vpack.c.b16 %v543, %v538
        %v584 = vpack.c.b16 %v544, %v539
        %v585 = vpack.c.b16 %v545, %v540
        %v586 = vpack.c.b16 %v546, %v541
        %v587 = vpack.c.b16 %v547, %v542
        %628 = vmatprep.subr.bf16.mxu0 %v549
        %629 = vmatpush1.bf16.msra.mxu0 %v548
        %630 = vmatprep.subr.bf16.mxu0 %v554
        %631 = vmatpush1.bf16.msra.mxu0 %v553
        %632 = vmatprep.subr.bf16.mxu0 %v559
        %633 = vmatpush1.bf16.msra.mxu0 %v558
        %634 = vmatprep.subr.bf16.mxu0 %v564
        %635 = vmatpush1.bf16.msra.mxu0 %v563
        %636 = vmatprep.subr.bf16.mxu0 %v569
        %637 = vmatpush1.bf16.msra.mxu0 %v568
        %638 = vmatprep.subr.bf16.mxu0 %v574
        %639 = vmatpush1.bf16.msra.mxu0 %v573
        %640 = vmatprep.subr.bf16.mxu0 %v579
        %641 = vmatpush1.bf16.msra.mxu0 %v578
        %642 = vmatprep.subr.bf16.mxu0 %v584
        %643 = vmatpush1.bf16.msra.mxu0 %v583
        %644 = vmatprep.subr.bf16.mxu0 0
        %645 = vmatpush1.bf16.msra.mxu0 0
        %646 = vmatprep.subr.bf16.mxu0 0
        %647 = vmatpush1.bf16.msra.mxu0 0
        %648 = vmatprep.subr.bf16.mxu0 0
        %649 = vmatpush1.bf16.msra.mxu0 0
        %650 = vmatprep.subr.bf16.mxu0 0
        %651 = vmatpush1.bf16.msra.mxu0 0
        %652 = vmatprep.subr.bf16.mxu0 0
        %653 = vmatpush1.bf16.msra.mxu0 0
        %654 = vmatprep.subr.bf16.mxu0 0
        %655 = vmatpush1.bf16.msra.mxu0 0
        %656 = vmatprep.subr.bf16.mxu0 0
        %657 = vmatpush1.bf16.msra.mxu0 0
        %658 = vmatprep.subr.bf16.mxu0 0
        %659 = vmatpush1.bf16.msra.mxu0 0
        %660 = vmatprep.mubr.bf16.mxu0 0
        %661 = vmatmul.mubr.bf16.gmra.mrb[0].mxu0 %v344
        %v662 = vpop.f32.mrb[0].mxu0
        %v663 = vadd.f32 %v398, %v662
        %v664 = vpop.f32.mrb[0].mxu0
        %v665 = vadd.f32 %v402, %v664
        %v666 = vpop.f32.mrb[0].mxu0
        %v667 = vadd.f32 %v398, %v666
        %v668 = vpop.f32.mrb[0].mxu0
        %v669 = vadd.f32 %v402, %v668
        %670 = vdwg.mxu0
        %671 = vmatprep.subr.bf16.mxu0 %v551
        %672 = vmatpush1.bf16.msra.mxu0 %v550
        %673 = vmatprep.subr.bf16.mxu0 %v556
        %674 = vmatpush1.bf16.msra.mxu0 %v555
        %675 = vmatprep.subr.bf16.mxu0 %v561
        %676 = vmatpush1.bf16.msra.mxu0 %v560
        %677 = vmatprep.subr.bf16.mxu0 %v566
        %678 = vmatpush1.bf16.msra.mxu0 %v565
        %679 = vmatprep.subr.bf16.mxu0 %v571
        %680 = vmatpush1.bf16.msra.mxu0 %v570
        %681 = vmatprep.subr.bf16.mxu0 %v576
        %682 = vmatpush1.bf16.msra.mxu0 %v575
        %683 = vmatprep.subr.bf16.mxu0 %v581
        %684 = vmatpush1.bf16.msra.mxu0 %v580
        %685 = vmatprep.subr.bf16.mxu0 %v586
        %686 = vmatpush1.bf16.msra.mxu0 %v585
        %687 = vmatprep.subr.bf16.mxu0 0
        %688 = vmatpush1.bf16.msra.mxu0 0
        %689 = vmatprep.subr.bf16.mxu0 0
        %690 = vmatpush1.bf16.msra.mxu0 0
        %691 = vmatprep.subr.bf16.mxu0 0
        %692 = vmatpush1.bf16.msra.mxu0 0
        %693 = vmatprep.subr.bf16.mxu0 0
        %694 = vmatpush1.bf16.msra.mxu0 0
        %695 = vmatprep.subr.bf16.mxu0 0
        %696 = vmatpush1.bf16.msra.mxu0 0
        %697 = vmatprep.subr.bf16.mxu0 0
        %698 = vmatpush1.bf16.msra.mxu0 0
        %699 = vmatprep.subr.bf16.mxu0 0
        %700 = vmatpush1.bf16.msra.mxu0 0
        %701 = vmatprep.subr.bf16.mxu0 0
        %702 = vmatpush1.bf16.msra.mxu0 0
        %703 = vmatprep.mubr.bf16.mxu0 0
        %704 = vmatmul.mubr.bf16.gmra.mrb[0].mxu0 %v344
        %v705 = vpop.f32.mrb[0].mxu0
        %v706 = vadd.f32 %v406, %v705
        %v707 = vpop.f32.mrb[0].mxu0
        %v708 = vadd.f32 %v410, %v707
        %v709 = vpop.f32.mrb[0].mxu0
        %v710 = vadd.f32 %v406, %v709
        %v711 = vpop.f32.mrb[0].mxu0
        %v712 = vadd.f32 %v410, %v711
        %713 = vdwg.mxu0
        %714 = vmatprep.subr.bf16.mxu0 0
        %715 = vmatpush1.bf16.msra.mxu0 %v552
        %716 = vmatprep.subr.bf16.mxu0 0
        %717 = vmatpush1.bf16.msra.mxu0 %v557
        %718 = vmatprep.subr.bf16.mxu0 0
        %719 = vmatpush1.bf16.msra.mxu0 %v562
        %720 = vmatprep.subr.bf16.mxu0 0
        %721 = vmatpush1.bf16.msra.mxu0 %v567
        %722 = vmatprep.subr.bf16.mxu0 0
        %723 = vmatpush1.bf16.msra.mxu0 %v572
        %724 = vmatprep.subr.bf16.mxu0 0
        %725 = vmatpush1.bf16.msra.mxu0 %v577
        %726 = vmatprep.subr.bf16.mxu0 0
        %727 = vmatpush1.bf16.msra.mxu0 %v582
        %728 = vmatprep.subr.bf16.mxu0 0
        %729 = vmatpush1.bf16.msra.mxu0 %v587
        %730 = vmatprep.subr.bf16.mxu0 0
        %731 = vmatpush1.bf16.msra.mxu0 0
        %732 = vmatprep.subr.bf16.mxu0 0
        %733 = vmatpush1.bf16.msra.mxu0 0
        %734 = vmatprep.subr.bf16.mxu0 0
        %735 = vmatpush1.bf16.msra.mxu0 0
        %736 = vmatprep.subr.bf16.mxu0 0
        %737 = vmatpush1.bf16.msra.mxu0 0
        %738 = vmatprep.subr.bf16.mxu0 0
        %739 = vmatpush1.bf16.msra.mxu0 0
        %740 = vmatprep.subr.bf16.mxu0 0
        %741 = vmatpush1.bf16.msra.mxu0 0
        %742 = vmatprep.subr.bf16.mxu0 0
        %743 = vmatpush1.bf16.msra.mxu0 0
        %744 = vmatprep.subr.bf16.mxu0 0
        %745 = vmatpush1.bf16.msra.mxu0 0
        %746 = vmatprep.mubr.bf16.mxu0 0
        %747 = vmatmul.mubr.bf16.gmra.mrb[0].mxu0 %v344
        %v748 = vpop.f32.mrb[0].mxu0
        %v749 = vadd.f32 %v414, %v748
        %v750 = vpop.f32.mrb[0].mxu0
        %v751 = vpop.f32.mrb[0].mxu0
        %v752 = vadd.f32 %v414, %v751
        %v753 = vpop.f32.mrb[0].mxu0
        %754 = vdwg.mxu0
        %v755 = vmax.f32 %v663, 0.0
        %v756 = vmax.f32 %v665, 0.0
        %v757 = vmax.f32 %v706, 0.0
        %v758 = vmax.f32 %v708, 0.0
        %v759 = vmax.f32 %v749, 0.0
        %v760 = vmax.f32 %v667, 0.0
        %v761 = vmax.f32 %v669, 0.0
        %v762 = vmax.f32 %v710, 0.0
        %v763 = vmax.f32 %v712, 0.0
        %v764 = vmax.f32 %v752, 0.0
        %v765 = vlaneseq
        %v766 = vshrl.u32 %v765, 7
        %v767 = vadd.s32 %v766, 8
        %v768 = vrot.slane %v755, 7
        %v769 = vrot.slane %v756, 7
        %v770 = vrot.slane %v757, 7
        %v771 = vrot.slane %v758, 7
        %v772 = vrot.slane %v759, 7
        %v773 = vrot.slane %v760, 7
        %v774 = vrot.slane %v761, 7
        %v775 = vrot.slane %v762, 7
        %v776 = vrot.slane %v763, 7
        %v777 = vrot.slane %v764, 7
        %vm778 = vcmp.lt.s32.totalorder %v766, 1
        %v779 = vsel %vm778, %v768, %v773
        %v780 = vsel %vm778, %v769, %v774
        %v781 = vsel %vm778, %v770, %v775
        %v782 = vsel %vm778, %v771, %v776
        %v783 = vsel %vm778, %v772, %v777
        %v784 = vsel %vm778, %v773, %v768
        %v785 = vsel %vm778, %v774, %v769
        %v786 = vsel %vm778, %v775, %v770
        %v787 = vsel %vm778, %v776, %v771
        %v788 = vsel %vm778, %v777, %v772
        %v789 = vadd.s32 %v766, 4294967295
        %v790 = vadd.s32 %v767, 4294967295
        %vm791 = vcmp.ge.s32.totalorder %v789, 0
        %vm792 = vcmp.ge.s32.totalorder %v790, 0
        %vm793 = vcmp.le.s32.totalorder %v789, 15
        %vm794 = vcmp.le.s32.totalorder %v790, 15
        %vm795 = vmand %vm791, %vm793
        %vm796 = vmand %vm792, %vm794
        %v797 = vsel %vm795, 1, 0
        %v798 = vsel %vm796, 1, 0
        %vm799 = vcmp.eq.s32.totalorder %v797, 1
        %vm800 = vcmp.eq.s32.totalorder %v798, 1
        %v801 = vsel %vm799, %v784, 0.0
        %v802 = vsel %vm799, %v785, 0.0
        %v803 = vsel %vm799, %v786, 0.0
        %v804 = vsel %vm799, %v787, 0.0
        %v805 = vsel %vm799, %v788, 0.0
        %v806 = vsel %vm800, %v779, 0.0
        %v807 = vsel %vm800, %v780, 0.0
        %v808 = vsel %vm800, %v781, 0.0
        %v809 = vsel %vm800, %v782, 0.0
        %v810 = vsel %vm800, %v783, 0.0
        %v811 = vld [vmem:[#allocation7] ss:$8 sm:$0xf]
        %v813 = vlaneseq
        %v814 = vshrl.u32 %v813, 7
        %v815 = vsub.s32 0, %v814
        %v816 = vrot.slane %v811, %v815
        %v817 = vlaneseq
        %v818 = vshrl.u32 %v817, 7
        %v819 = vsub.s32 1, %v818
        %v820 = vrot.slane %v811, %v819
        %v821 = vlaneseq
        %v822 = vshrl.u32 %v821, 7
        %v823 = vsub.s32 2, %v822
        %v824 = vrot.slane %v811, %v823
        %v825 = vlaneseq
        %v826 = vshrl.u32 %v825, 7
        %v827 = vsub.s32 3, %v826
        %v828 = vrot.slane %v811, %v827
        %v833 = vmul.f32 %v801, %v816
        %v834 = vmul.f32 %v802, %v820
        %v835 = vmul.f32 %v803, %v824
        %v836 = vmul.f32 %v804, %v828
        %v837 = vmul.f32 %v806, %v816
        %v838 = vmul.f32 %v807, %v820
        %v839 = vmul.f32 %v808, %v824
        %v840 = vmul.f32 %v809, %v828
        %v841 = vadd.f32 %v833, 0.0
        %v842 = vadd.f32 %v834, 0.0
        %v843 = vadd.f32 %v835, 0.0
        %v844 = vadd.f32 %v836, 0.0
        %v845 = vadd.f32 %v837, 0.0
        %v846 = vadd.f32 %v838, 0.0
        %v847 = vadd.f32 %v839, 0.0
        %v848 = vadd.f32 %v840, 0.0
        %s849 = scalar_lea.vmem [#allocation7], 1
        %v850 = vld [vmem:[%s849] ss:$8 sm:$0xf]
        %v852 = vlaneseq
        %v853 = vshrl.u32 %v852, 7
        %v854 = vsub.s32 0, %v853
        %v855 = vrot.slane %v850, %v854
        %v856 = vlaneseq
        %v857 = vshrl.u32 %v856, 7
        %v858 = vsub.s32 1, %v857
        %v859 = vrot.slane %v850, %v858
        %v860 = vlaneseq
        %v861 = vshrl.u32 %v860, 7
        %v862 = vsub.s32 2, %v861
        %v863 = vrot.slane %v850, %v862
        %v864 = vlaneseq
        %v865 = vshrl.u32 %v864, 7
        %v866 = vsub.s32 3, %v865
        %v867 = vrot.slane %v850, %v866
        %868 = vrot.lane.b32.xlu0 %v855, 32
        %v869 = vpop.permute.xlu0 %868
        %870 = vrot.lane.b32.xlu0 %v859, 32
        %v871 = vpop.permute.xlu0 %870
        %872 = vrot.lane.b32.xlu0 %v863, 32
        %v873 = vpop.permute.xlu0 %872
        %874 = vrot.lane.b32.xlu0 %v867, 32
        %v875 = vpop.permute.xlu0 %874
        %vm876 = vcmask 261120
        %v877 = vsel %vm876, %v869, %v871
        %v878 = vsel %vm876, %v871, %v873
        %v879 = vsel %vm876, %v873, %v875
        %v885 = vmul.f32 %v801, %v869
        %v886 = vmul.f32 %v802, %v877
        %v887 = vmul.f32 %v803, %v878
        %v888 = vmul.f32 %v804, %v879
        %v889 = vmul.f32 %v805, %v875
        %v890 = vmul.f32 %v806, %v869
        %v891 = vmul.f32 %v807, %v877
        %v892 = vmul.f32 %v808, %v878
        %v893 = vmul.f32 %v809, %v879
        %v894 = vmul.f32 %v810, %v875
        %905 = vrot.lane.b32.xlu0 %v885, 96
        %v906 = vpop.permute.xlu0 %905
        %907 = vrot.lane.b32.xlu0 %v886, 96
        %v908 = vpop.permute.xlu0 %907
        %909 = vrot.lane.b32.xlu0 %v887, 96
        %v910 = vpop.permute.xlu0 %909
        %911 = vrot.lane.b32.xlu0 %v888, 96
        %v912 = vpop.permute.xlu0 %911
        %913 = vrot.lane.b32.xlu0 %v889, 96
        %v914 = vpop.permute.xlu0 %913
        %915 = vrot.lane.b32.xlu0 %v890, 96
        %v916 = vpop.permute.xlu0 %915
        %917 = vrot.lane.b32.xlu0 %v891, 96
        %v918 = vpop.permute.xlu0 %917
        %919 = vrot.lane.b32.xlu0 %v892, 96
        %v920 = vpop.permute.xlu0 %919
        %921 = vrot.lane.b32.xlu0 %v893, 96
        %v922 = vpop.permute.xlu0 %921
        %923 = vrot.lane.b32.xlu0 %v894, 96
        %v924 = vpop.permute.xlu0 %923
        %vm925 = vcmask 785408
        %v926 = vsel %vm925, %v906, %v908
        %v927 = vsel %vm925, %v908, %v910
        %v928 = vsel %vm925, %v910, %v912
        %v929 = vsel %vm925, %v912, %v914
        %v930 = vsel %vm925, %v916, %v918
        %v931 = vsel %vm925, %v918, %v920
        %v932 = vsel %vm925, %v920, %v922
        %v933 = vsel %vm925, %v922, %v924
        %v942 = vadd.f32 %v841, %v926
        %v943 = vadd.f32 %v842, %v927
        %v944 = vadd.f32 %v843, %v928
        %v945 = vadd.f32 %v844, %v929
        %v946 = vadd.f32 %v845, %v930
        %v947 = vadd.f32 %v846, %v931
        %v948 = vadd.f32 %v847, %v932
        %v949 = vadd.f32 %v848, %v933
        %s950 = scalar_lea.vmem [#allocation7], 2
        %v951 = vld [vmem:[%s950] ss:$8 sm:$0xf]
        %v953 = vlaneseq
        %v954 = vshrl.u32 %v953, 7
        %v955 = vsub.s32 0, %v954
        %v956 = vrot.slane %v951, %v955
        %v957 = vlaneseq
        %v958 = vshrl.u32 %v957, 7
        %v959 = vsub.s32 1, %v958
        %v960 = vrot.slane %v951, %v959
        %v961 = vlaneseq
        %v962 = vshrl.u32 %v961, 7
        %v963 = vsub.s32 2, %v962
        %v964 = vrot.slane %v951, %v963
        %v965 = vlaneseq
        %v966 = vshrl.u32 %v965, 7
        %v967 = vsub.s32 3, %v966
        %v968 = vrot.slane %v951, %v967
        %969 = vrot.lane.b32.xlu0 %v956, 64
        %v970 = vpop.permute.xlu0 %969
        %971 = vrot.lane.b32.xlu0 %v960, 64
        %v972 = vpop.permute.xlu0 %971
        %973 = vrot.lane.b32.xlu0 %v964, 64
        %v974 = vpop.permute.xlu0 %973
        %975 = vrot.lane.b32.xlu0 %v968, 64
        %v976 = vpop.permute.xlu0 %975
        %vm977 = vcmask 523264
        %v978 = vsel %vm977, %v970, %v972
        %v979 = vsel %vm977, %v972, %v974
        %v980 = vsel %vm977, %v974, %v976
        %v986 = vmul.f32 %v801, %v970
        %v987 = vmul.f32 %v802, %v978
        %v988 = vmul.f32 %v803, %v979
        %v989 = vmul.f32 %v804, %v980
        %v990 = vmul.f32 %v805, %v976
        %v991 = vmul.f32 %v806, %v970
        %v992 = vmul.f32 %v807, %v978
        %v993 = vmul.f32 %v808, %v979
        %v994 = vmul.f32 %v809, %v980
        %v995 = vmul.f32 %v810, %v976
        %1006 = vrot.lane.b32.xlu0 %v986, 64
        %v1007 = vpop.permute.xlu0 %1006
        %1008 = vrot.lane.b32.xlu0 %v987, 64
        %v1009 = vpop.permute.xlu0 %1008
        %1010 = vrot.lane.b32.xlu0 %v988, 64
        %v1011 = vpop.permute.xlu0 %1010
        %1012 = vrot.lane.b32.xlu0 %v989, 64
        %v1013 = vpop.permute.xlu0 %1012
        %1014 = vrot.lane.b32.xlu0 %v990, 64
        %v1015 = vpop.permute.xlu0 %1014
        %1016 = vrot.lane.b32.xlu0 %v991, 64
        %v1017 = vpop.permute.xlu0 %1016
        %1018 = vrot.lane.b32.xlu0 %v992, 64
        %v1019 = vpop.permute.xlu0 %1018
        %1020 = vrot.lane.b32.xlu0 %v993, 64
        %v1021 = vpop.permute.xlu0 %1020
        %1022 = vrot.lane.b32.xlu0 %v994, 64
        %v1023 = vpop.permute.xlu0 %1022
        %1024 = vrot.lane.b32.xlu0 %v995, 64
        %v1025 = vpop.permute.xlu0 %1024
        %v1026 = vsel %vm977, %v1007, %v1009
        %v1027 = vsel %vm977, %v1009, %v1011
        %v1028 = vsel %vm977, %v1011, %v1013
        %v1029 = vsel %vm977, %v1013, %v1015
        %v1030 = vsel %vm977, %v1017, %v1019
        %v1031 = vsel %vm977, %v1019, %v1021
        %v1032 = vsel %vm977, %v1021, %v1023
        %v1033 = vsel %vm977, %v1023, %v1025
        %v1042 = vadd.f32 %v942, %v1026
        %v1043 = vadd.f32 %v943, %v1027
        %v1044 = vadd.f32 %v944, %v1028
        %v1045 = vadd.f32 %v945, %v1029
        %v1046 = vadd.f32 %v946, %v1030
        %v1047 = vadd.f32 %v947, %v1031
        %v1048 = vadd.f32 %v948, %v1032
        %v1049 = vadd.f32 %v949, %v1033
        %s1050 = scalar_lea.vmem [#allocation7], 3
        %v1051 = vld [vmem:[%s1050] ss:$8 sm:$0xf]
        %v1053 = vlaneseq
        %v1054 = vshrl.u32 %v1053, 7
        %v1055 = vsub.s32 0, %v1054
        %v1056 = vrot.slane %v1051, %v1055
        %v1057 = vlaneseq
        %v1058 = vshrl.u32 %v1057, 7
        %v1059 = vsub.s32 1, %v1058
        %v1060 = vrot.slane %v1051, %v1059
        %v1061 = vlaneseq
        %v1062 = vshrl.u32 %v1061, 7
        %v1063 = vsub.s32 2, %v1062
        %v1064 = vrot.slane %v1051, %v1063
        %v1065 = vlaneseq
        %v1066 = vshrl.u32 %v1065, 7
        %v1067 = vsub.s32 3, %v1066
        %v1068 = vrot.slane %v1051, %v1067
        %v1073 = vmul.f32 %v755, %v1056
        %v1074 = vmul.f32 %v756, %v1060
        %v1075 = vmul.f32 %v757, %v1064
        %v1076 = vmul.f32 %v758, %v1068
        %v1077 = vmul.f32 %v760, %v1056
        %v1078 = vmul.f32 %v761, %v1060
        %v1079 = vmul.f32 %v762, %v1064
        %v1080 = vmul.f32 %v763, %v1068
        %v1081 = vadd.f32 %v1042, %v1073
        %v1082 = vadd.f32 %v1043, %v1074
        %v1083 = vadd.f32 %v1044, %v1075
        %v1084 = vadd.f32 %v1045, %v1076
        %v1085 = vadd.f32 %v1046, %v1077
        %v1086 = vadd.f32 %v1047, %v1078
        %v1087 = vadd.f32 %v1048, %v1079
        %v1088 = vadd.f32 %v1049, %v1080
        %s1089 = scalar_lea.vmem [#allocation7], 4
        %v1090 = vld [vmem:[%s1089] ss:$8 sm:$0xf]
        %v1092 = vlaneseq
        %v1093 = vshrl.u32 %v1092, 7
        %v1094 = vsub.s32 0, %v1093
        %v1095 = vrot.slane %v1090, %v1094
        %v1096 = vlaneseq
        %v1097 = vshrl.u32 %v1096, 7
        %v1098 = vsub.s32 1, %v1097
        %v1099 = vrot.slane %v1090, %v1098
        %v1100 = vlaneseq
        %v1101 = vshrl.u32 %v1100, 7
        %v1102 = vsub.s32 2, %v1101
        %v1103 = vrot.slane %v1090, %v1102
        %v1104 = vlaneseq
        %v1105 = vshrl.u32 %v1104, 7
        %v1106 = vsub.s32 3, %v1105
        %v1107 = vrot.slane %v1090, %v1106
        %1108 = vrot.lane.b32.xlu0 %v1095, 32
        %v1109 = vpop.permute.xlu0 %1108
        %1110 = vrot.lane.b32.xlu0 %v1099, 32
        %v1111 = vpop.permute.xlu0 %1110
        %1112 = vrot.lane.b32.xlu0 %v1103, 32
        %v1113 = vpop.permute.xlu0 %1112
        %1114 = vrot.lane.b32.xlu0 %v1107, 32
        %v1115 = vpop.permute.xlu0 %1114
        %v1116 = vsel %vm876, %v1109, %v1111
        %v1117 = vsel %vm876, %v1111, %v1113
        %v1118 = vsel %vm876, %v1113, %v1115
        %v1124 = vmul.f32 %v755, %v1109
        %v1125 = vmul.f32 %v756, %v1116
        %v1126 = vmul.f32 %v757, %v1117
        %v1127 = vmul.f32 %v758, %v1118
        %v1128 = vmul.f32 %v759, %v1115
        %v1129 = vmul.f32 %v760, %v1109
        %v1130 = vmul.f32 %v761, %v1116
        %v1131 = vmul.f32 %v762, %v1117
        %v1132 = vmul.f32 %v763, %v1118
        %v1133 = vmul.f32 %v764, %v1115
        %1144 = vrot.lane.b32.xlu0 %v1124, 96
        %v1145 = vpop.permute.xlu0 %1144
        %1146 = vrot.lane.b32.xlu0 %v1125, 96
        %v1147 = vpop.permute.xlu0 %1146
        %1148 = vrot.lane.b32.xlu0 %v1126, 96
        %v1149 = vpop.permute.xlu0 %1148
        %1150 = vrot.lane.b32.xlu0 %v1127, 96
        %v1151 = vpop.permute.xlu0 %1150
        %1152 = vrot.lane.b32.xlu0 %v1128, 96
        %v1153 = vpop.permute.xlu0 %1152
        %1154 = vrot.lane.b32.xlu0 %v1129, 96
        %v1155 = vpop.permute.xlu0 %1154
        %1156 = vrot.lane.b32.xlu0 %v1130, 96
        %v1157 = vpop.permute.xlu0 %1156
        %1158 = vrot.lane.b32.xlu0 %v1131, 96
        %v1159 = vpop.permute.xlu0 %1158
        %1160 = vrot.lane.b32.xlu0 %v1132, 96
        %v1161 = vpop.permute.xlu0 %1160
        %1162 = vrot.lane.b32.xlu0 %v1133, 96
        %v1163 = vpop.permute.xlu0 %1162
        %v1164 = vsel %vm925, %v1145, %v1147
        %v1165 = vsel %vm925, %v1147, %v1149
        %v1166 = vsel %vm925, %v1149, %v1151
        %v1167 = vsel %vm925, %v1151, %v1153
        %v1168 = vsel %vm925, %v1155, %v1157
        %v1169 = vsel %vm925, %v1157, %v1159
        %v1170 = vsel %vm925, %v1159, %v1161
        %v1171 = vsel %vm925, %v1161, %v1163
        %v1180 = vadd.f32 %v1081, %v1164
        %v1181 = vadd.f32 %v1082, %v1165
        %v1182 = vadd.f32 %v1083, %v1166
        %v1183 = vadd.f32 %v1084, %v1167
        %v1184 = vadd.f32 %v1085, %v1168
        %v1185 = vadd.f32 %v1086, %v1169
        %v1186 = vadd.f32 %v1087, %v1170
        %v1187 = vadd.f32 %v1088, %v1171
        %s1188 = scalar_lea.vmem [#allocation7], 5
        %v1189 = vld [vmem:[%s1188] ss:$8 sm:$0xf]
        %v1191 = vlaneseq
        %v1192 = vshrl.u32 %v1191, 7
        %v1193 = vsub.s32 0, %v1192
        %v1194 = vrot.slane %v1189, %v1193
        %v1195 = vlaneseq
        %v1196 = vshrl.u32 %v1195, 7
        %v1197 = vsub.s32 1, %v1196
        %v1198 = vrot.slane %v1189, %v1197
        %v1199 = vlaneseq
        %v1200 = vshrl.u32 %v1199, 7
        %v1201 = vsub.s32 2, %v1200
        %v1202 = vrot.slane %v1189, %v1201
        %v1203 = vlaneseq
        %v1204 = vshrl.u32 %v1203, 7
        %v1205 = vsub.s32 3, %v1204
        %v1206 = vrot.slane %v1189, %v1205
        %1207 = vrot.lane.b32.xlu0 %v1194, 64
        %v1208 = vpop.permute.xlu0 %1207
        %1209 = vrot.lane.b32.xlu0 %v1198, 64
        %v1210 = vpop.permute.xlu0 %1209
        %1211 = vrot.lane.b32.xlu0 %v1202, 64
        %v1212 = vpop.permute.xlu0 %1211
        %1213 = vrot.lane.b32.xlu0 %v1206, 64
        %v1214 = vpop.permute.xlu0 %1213
        %v1215 = vsel %vm977, %v1208, %v1210
        %v1216 = vsel %vm977, %v1210, %v1212
        %v1217 = vsel %vm977, %v1212, %v1214
        %v1223 = vmul.f32 %v755, %v1208
        %v1224 = vmul.f32 %v756, %v1215
        %v1225 = vmul.f32 %v757, %v1216
        %v1226 = vmul.f32 %v758, %v1217
        %v1227 = vmul.f32 %v759, %v1214
        %v1228 = vmul.f32 %v760, %v1208
        %v1229 = vmul.f32 %v761, %v1215
        %v1230 = vmul.f32 %v762, %v1216
        %v1231 = vmul.f32 %v763, %v1217
        %v1232 = vmul.f32 %v764, %v1214
        %1243 = vrot.lane.b32.xlu0 %v1223, 64
        %v1244 = vpop.permute.xlu0 %1243
        %1245 = vrot.lane.b32.xlu0 %v1224, 64
        %v1246 = vpop.permute.xlu0 %1245
        %1247 = vrot.lane.b32.xlu0 %v1225, 64
        %v1248 = vpop.permute.xlu0 %1247
        %1249 = vrot.lane.b32.xlu0 %v1226, 64
        %v1250 = vpop.permute.xlu0 %1249
        %1251 = vrot.lane.b32.xlu0 %v1227, 64
        %v1252 = vpop.permute.xlu0 %1251
        %1253 = vrot.lane.b32.xlu0 %v1228, 64
        %v1254 = vpop.permute.xlu0 %1253
        %1255 = vrot.lane.b32.xlu0 %v1229, 64
        %v1256 = vpop.permute.xlu0 %1255
        %1257 = vrot.lane.b32.xlu0 %v1230, 64
        %v1258 = vpop.permute.xlu0 %1257
        %1259 = vrot.lane.b32.xlu0 %v1231, 64
        %v1260 = vpop.permute.xlu0 %1259
        %1261 = vrot.lane.b32.xlu0 %v1232, 64
        %v1262 = vpop.permute.xlu0 %1261
        %v1263 = vsel %vm977, %v1244, %v1246
        %v1264 = vsel %vm977, %v1246, %v1248
        %v1265 = vsel %vm977, %v1248, %v1250
        %v1266 = vsel %vm977, %v1250, %v1252
        %v1267 = vsel %vm977, %v1254, %v1256
        %v1268 = vsel %vm977, %v1256, %v1258
        %v1269 = vsel %vm977, %v1258, %v1260
        %v1270 = vsel %vm977, %v1260, %v1262
        %v1279 = vadd.f32 %v1180, %v1263
        %v1280 = vadd.f32 %v1181, %v1264
        %v1281 = vadd.f32 %v1182, %v1265
        %v1282 = vadd.f32 %v1183, %v1266
        %v1283 = vadd.f32 %v1184, %v1267
        %v1284 = vadd.f32 %v1185, %v1268
        %v1285 = vadd.f32 %v1186, %v1269
        %v1286 = vadd.f32 %v1187, %v1270
        %v1287 = vrot.slane %v755, 1
        %v1288 = vrot.slane %v756, 1
        %v1289 = vrot.slane %v757, 1
        %v1290 = vrot.slane %v758, 1
        %v1291 = vrot.slane %v759, 1
        %v1292 = vrot.slane %v760, 1
        %v1293 = vrot.slane %v761, 1
        %v1294 = vrot.slane %v762, 1
        %v1295 = vrot.slane %v763, 1
        %v1296 = vrot.slane %v764, 1
        %vm1297 = vcmp.lt.s32.totalorder %v766, 7
        %v1298 = vsel %vm1297, %v1287, %v1292
        %v1299 = vsel %vm1297, %v1288, %v1293
        %v1300 = vsel %vm1297, %v1289, %v1294
        %v1301 = vsel %vm1297, %v1290, %v1295
        %v1302 = vsel %vm1297, %v1291, %v1296
        %v1303 = vsel %vm1297, %v1292, %v1287
        %v1304 = vsel %vm1297, %v1293, %v1288
        %v1305 = vsel %vm1297, %v1294, %v1289
        %v1306 = vsel %vm1297, %v1295, %v1290
        %v1307 = vsel %vm1297, %v1296, %v1291
        %v1308 = vadd.s32 %v766, 1
        %v1309 = vadd.s32 %v767, 1
        %vm1310 = vcmp.ge.s32.totalorder %v1308, 0
        %vm1311 = vcmp.ge.s32.totalorder %v1309, 0
        %vm1312 = vcmp.le.s32.totalorder %v1308, 15
        %vm1313 = vcmp.le.s32.totalorder %v1309, 15
        %vm1314 = vmand %vm1310, %vm1312
        %vm1315 = vmand %vm1311, %vm1313
        %v1316 = vsel %vm1314, 1, 0
        %v1317 = vsel %vm1315, 1, 0
        %vm1318 = vcmp.eq.s32.totalorder %v1316, 1
        %vm1319 = vcmp.eq.s32.totalorder %v1317, 1
        %v1320 = vsel %vm1318, %v1298, 0.0
        %v1321 = vsel %vm1318, %v1299, 0.0
        %v1322 = vsel %vm1318, %v1300, 0.0
        %v1323 = vsel %vm1318, %v1301, 0.0
        %v1324 = vsel %vm1318, %v1302, 0.0
        %v1325 = vsel %vm1319, %v1303, 0.0
        %v1326 = vsel %vm1319, %v1304, 0.0
        %v1327 = vsel %vm1319, %v1305, 0.0
        %v1328 = vsel %vm1319, %v1306, 0.0
        %v1329 = vsel %vm1319, %v1307, 0.0
        %s1330 = scalar_lea.vmem [#allocation7], 6
        %v1331 = vld [vmem:[%s1330] ss:$8 sm:$0xf]
        %v1333 = vlaneseq
        %v1334 = vshrl.u32 %v1333, 7
        %v1335 = vsub.s32 0, %v1334
        %v1336 = vrot.slane %v1331, %v1335
        %v1337 = vlaneseq
        %v1338 = vshrl.u32 %v1337, 7
        %v1339 = vsub.s32 1, %v1338
        %v1340 = vrot.slane %v1331, %v1339
        %v1341 = vlaneseq
        %v1342 = vshrl.u32 %v1341, 7
        %v1343 = vsub.s32 2, %v1342
        %v1344 = vrot.slane %v1331, %v1343
        %v1345 = vlaneseq
        %v1346 = vshrl.u32 %v1345, 7
        %v1347 = vsub.s32 3, %v1346
        %v1348 = vrot.slane %v1331, %v1347
        %v1353 = vmul.f32 %v1320, %v1336
        %v1354 = vmul.f32 %v1321, %v1340
        %v1355 = vmul.f32 %v1322, %v1344
        %v1356 = vmul.f32 %v1323, %v1348
        %v1357 = vmul.f32 %v1325, %v1336
        %v1358 = vmul.f32 %v1326, %v1340
        %v1359 = vmul.f32 %v1327, %v1344
        %v1360 = vmul.f32 %v1328, %v1348
        %v1361 = vadd.f32 %v1279, %v1353
        %v1362 = vadd.f32 %v1280, %v1354
        %v1363 = vadd.f32 %v1281, %v1355
        %v1364 = vadd.f32 %v1282, %v1356
        %v1365 = vadd.f32 %v1283, %v1357
        %v1366 = vadd.f32 %v1284, %v1358
        %v1367 = vadd.f32 %v1285, %v1359
        %v1368 = vadd.f32 %v1286, %v1360
        %s1369 = scalar_lea.vmem [#allocation7], 7
        %v1370 = vld [vmem:[%s1369] ss:$8 sm:$0xf]
        %v1372 = vlaneseq
        %v1373 = vshrl.u32 %v1372, 7
        %v1374 = vsub.s32 0, %v1373
        %v1375 = vrot.slane %v1370, %v1374
        %v1376 = vlaneseq
        %v1377 = vshrl.u32 %v1376, 7
        %v1378 = vsub.s32 1, %v1377
        %v1379 = vrot.slane %v1370, %v1378
        %v1380 = vlaneseq
        %v1381 = vshrl.u32 %v1380, 7
        %v1382 = vsub.s32 2, %v1381
        %v1383 = vrot.slane %v1370, %v1382
        %v1384 = vlaneseq
        %v1385 = vshrl.u32 %v1384, 7
        %v1386 = vsub.s32 3, %v1385
        %v1387 = vrot.slane %v1370, %v1386
        %1388 = vrot.lane.b32.xlu0 %v1375, 32
        %v1389 = vpop.permute.xlu0 %1388
        %1390 = vrot.lane.b32.xlu0 %v1379, 32
        %v1391 = vpop.permute.xlu0 %1390
        %1392 = vrot.lane.b32.xlu0 %v1383, 32
        %v1393 = vpop.permute.xlu0 %1392
        %1394 = vrot.lane.b32.xlu0 %v1387, 32
        %v1395 = vpop.permute.xlu0 %1394
        %v1396 = vsel %vm876, %v1389, %v1391
        %v1397 = vsel %vm876, %v1391, %v1393
        %v1398 = vsel %vm876, %v1393, %v1395
        %v1404 = vmul.f32 %v1320, %v1389
        %v1405 = vmul.f32 %v1321, %v1396
        %v1406 = vmul.f32 %v1322, %v1397
        %v1407 = vmul.f32 %v1323, %v1398
        %v1408 = vmul.f32 %v1324, %v1395
        %v1409 = vmul.f32 %v1325, %v1389
        %v1410 = vmul.f32 %v1326, %v1396
        %v1411 = vmul.f32 %v1327, %v1397
        %v1412 = vmul.f32 %v1328, %v1398
        %v1413 = vmul.f32 %v1329, %v1395
        %1424 = vrot.lane.b32.xlu0 %v1404, 96
        %v1425 = vpop.permute.xlu0 %1424
        %1426 = vrot.lane.b32.xlu0 %v1405, 96
        %v1427 = vpop.permute.xlu0 %1426
        %1428 = vrot.lane.b32.xlu0 %v1406, 96
        %v1429 = vpop.permute.xlu0 %1428
        %1430 = vrot.lane.b32.xlu0 %v1407, 96
        %v1431 = vpop.permute.xlu0 %1430
        %1432 = vrot.lane.b32.xlu0 %v1408, 96
        %v1433 = vpop.permute.xlu0 %1432
        %1434 = vrot.lane.b32.xlu0 %v1409, 96
        %v1435 = vpop.permute.xlu0 %1434
        %1436 = vrot.lane.b32.xlu0 %v1410, 96
        %v1437 = vpop.permute.xlu0 %1436
        %1438 = vrot.lane.b32.xlu0 %v1411, 96
        %v1439 = vpop.permute.xlu0 %1438
        %1440 = vrot.lane.b32.xlu0 %v1412, 96
        %v1441 = vpop.permute.xlu0 %1440
        %1442 = vrot.lane.b32.xlu0 %v1413, 96
        %v1443 = vpop.permute.xlu0 %1442
        %v1444 = vsel %vm925, %v1425, %v1427
        %v1445 = vsel %vm925, %v1427, %v1429
        %v1446 = vsel %vm925, %v1429, %v1431
        %v1447 = vsel %vm925, %v1431, %v1433
        %v1448 = vsel %vm925, %v1435, %v1437
        %v1449 = vsel %vm925, %v1437, %v1439
        %v1450 = vsel %vm925, %v1439, %v1441
        %v1451 = vsel %vm925, %v1441, %v1443
        %v1460 = vadd.f32 %v1361, %v1444
        %v1461 = vadd.f32 %v1362, %v1445
        %v1462 = vadd.f32 %v1363, %v1446
        %v1463 = vadd.f32 %v1364, %v1447
        %v1464 = vadd.f32 %v1365, %v1448
        %v1465 = vadd.f32 %v1366, %v1449
        %v1466 = vadd.f32 %v1367, %v1450
        %v1467 = vadd.f32 %v1368, %v1451
        %s1468 = scalar_lea.vmem [#allocation7], 32
        %v1469 = vld [vmem:[%s1468] ss:$8 sm:$0xf]
        %v1471 = vlaneseq
        %v1472 = vshrl.u32 %v1471, 7
        %v1473 = vsub.s32 0, %v1472
        %v1474 = vrot.slane %v1469, %v1473
        %v1475 = vlaneseq
        %v1476 = vshrl.u32 %v1475, 7
        %v1477 = vsub.s32 1, %v1476
        %v1478 = vrot.slane %v1469, %v1477
        %v1479 = vlaneseq
        %v1480 = vshrl.u32 %v1479, 7
        %v1481 = vsub.s32 2, %v1480
        %v1482 = vrot.slane %v1469, %v1481
        %v1483 = vlaneseq
        %v1484 = vshrl.u32 %v1483, 7
        %v1485 = vsub.s32 3, %v1484
        %v1486 = vrot.slane %v1469, %v1485
        %1487 = vrot.lane.b32.xlu0 %v1474, 64
        %v1488 = vpop.permute.xlu0 %1487
        %1489 = vrot.lane.b32.xlu0 %v1478, 64
        %v1490 = vpop.permute.xlu0 %1489
        %1491 = vrot.lane.b32.xlu0 %v1482, 64
        %v1492 = vpop.permute.xlu0 %1491
        %1493 = vrot.lane.b32.xlu0 %v1486, 64
        %v1494 = vpop.permute.xlu0 %1493
        %v1495 = vsel %vm977, %v1488, %v1490
        %v1496 = vsel %vm977, %v1490, %v1492
        %v1497 = vsel %vm977, %v1492, %v1494
        %v1503 = vmul.f32 %v1320, %v1488
        %v1504 = vmul.f32 %v1321, %v1495
        %v1505 = vmul.f32 %v1322, %v1496
        %v1506 = vmul.f32 %v1323, %v1497
        %v1507 = vmul.f32 %v1324, %v1494
        %v1508 = vmul.f32 %v1325, %v1488
        %v1509 = vmul.f32 %v1326, %v1495
        %v1510 = vmul.f32 %v1327, %v1496
        %v1511 = vmul.f32 %v1328, %v1497
        %v1512 = vmul.f32 %v1329, %v1494
        %1523 = vrot.lane.b32.xlu0 %v1503, 64
        %v1524 = vpop.permute.xlu0 %1523
        %1525 = vrot.lane.b32.xlu0 %v1504, 64
        %v1526 = vpop.permute.xlu0 %1525
        %1527 = vrot.lane.b32.xlu0 %v1505, 64
        %v1528 = vpop.permute.xlu0 %1527
        %1529 = vrot.lane.b32.xlu0 %v1506, 64
        %v1530 = vpop.permute.xlu0 %1529
        %1531 = vrot.lane.b32.xlu0 %v1507, 64
        %v1532 = vpop.permute.xlu0 %1531
        %1533 = vrot.lane.b32.xlu0 %v1508, 64
        %v1534 = vpop.permute.xlu0 %1533
        %1535 = vrot.lane.b32.xlu0 %v1509, 64
        %v1536 = vpop.permute.xlu0 %1535
        %1537 = vrot.lane.b32.xlu0 %v1510, 64
        %v1538 = vpop.permute.xlu0 %1537
        %1539 = vrot.lane.b32.xlu0 %v1511, 64
        %v1540 = vpop.permute.xlu0 %1539
        %1541 = vrot.lane.b32.xlu0 %v1512, 64
        %v1542 = vpop.permute.xlu0 %1541
        %v1543 = vsel %vm977, %v1524, %v1526
        %v1544 = vsel %vm977, %v1526, %v1528
        %v1545 = vsel %vm977, %v1528, %v1530
        %v1546 = vsel %vm977, %v1530, %v1532
        %v1547 = vsel %vm977, %v1534, %v1536
        %v1548 = vsel %vm977, %v1536, %v1538
        %v1549 = vsel %vm977, %v1538, %v1540
        %v1550 = vsel %vm977, %v1540, %v1542
        %v1559 = vadd.f32 %v1460, %v1543
        %v1560 = vadd.f32 %v1461, %v1544
        %v1561 = vadd.f32 %v1462, %v1545
        %v1562 = vadd.f32 %v1463, %v1546
        %v1563 = vadd.f32 %v1464, %v1547
        %v1564 = vadd.f32 %v1465, %v1548
        %v1565 = vadd.f32 %v1466, %v1549
        %v1566 = vadd.f32 %v1467, %v1550
        %v1567 = vld [vmem:[%s4] sm:$0xf]
        %v1569 = vlaneseq
        %v1570 = vshrl.u32 %v1569, 7
        %v1571 = vsub.s32 0, %v1570
        %v1572 = vrot.slane %v1567, %v1571
        %v1573 = vlaneseq
        %v1574 = vshrl.u32 %v1573, 7
        %v1575 = vsub.s32 1, %v1574
        %v1576 = vrot.slane %v1567, %v1575
        %v1577 = vlaneseq
        %v1578 = vshrl.u32 %v1577, 7
        %v1579 = vsub.s32 2, %v1578
        %v1580 = vrot.slane %v1567, %v1579
        %v1581 = vlaneseq
        %v1582 = vshrl.u32 %v1581, 7
        %v1583 = vsub.s32 3, %v1582
        %v1584 = vrot.slane %v1567, %v1583
        %v1589 = vadd.f32 %v1559, %v1572
        %v1590 = vadd.f32 %v1560, %v1576
        %v1591 = vadd.f32 %v1561, %v1580
        %v1592 = vadd.f32 %v1562, %v1584
        %v1593 = vadd.f32 %v1563, %v1572
        %v1594 = vadd.f32 %v1564, %v1576
        %v1595 = vadd.f32 %v1565, %v1580
        %v1596 = vadd.f32 %v1566, %v1584
        %v1597 = vmax.f32 %v1589, 0.0
        %v1598 = vmax.f32 %v1590, 0.0
        %v1599 = vmax.f32 %v1591, 0.0
        %v1600 = vmax.f32 %v1592, 0.0
        %v1601 = vmax.f32 %v1593, 0.0
        %v1602 = vmax.f32 %v1594, 0.0
        %v1603 = vmax.f32 %v1595, 0.0
        %v1604 = vmax.f32 %v1596, 0.0
        %v1605 = vpack.c.bf16 %v1601, %v1597
        %v1606 = vpack.c.bf16 %v1602, %v1598
        %v1607 = vpack.c.bf16 %v1603, %v1599
        %v1608 = vpack.c.bf16 %v1604, %v1600
        %v1609 = vld [vmem:[#allocation8] sm:$0xf]
        %v1610 = vld [vmem:[#allocation8 + $0x4] sm:$0xf]
        %v1611 = vld [vmem:[#allocation8 + $0x8] sm:$0xf]
        %v1612 = vld [vmem:[#allocation8 + $0xc] sm:$0xf]
        %v1613 = vld [vmem:[#allocation8 + $0x10] sm:$0xf]
        %v1614 = vld [vmem:[#allocation8 + $0x14] sm:$0xf]
        %v1615 = vld [vmem:[#allocation8 + $0x18] sm:$0xf]
        %v1616 = vld [vmem:[#allocation8 + $0x1c] sm:$0xf]
        %v1617 = vld [vmem:[#allocation8 + $0x20] sm:$0xf]
        %v1618 = vld [vmem:[#allocation8 + $0x24] sm:$0xf]
        %v1619 = vld [vmem:[#allocation8 + $0x28] sm:$0xf]
        %v1620 = vld [vmem:[#allocation8 + $0x2c] sm:$0xf]
        %v1621 = vld [vmem:[#allocation8 + $0x30] sm:$0xf]
        %v1622 = vld [vmem:[#allocation8 + $0x34] sm:$0xf]
        %v1623 = vld [vmem:[#allocation8 + $0x38] sm:$0xf]
        %v1624 = vld [vmem:[#allocation8 + $0x3c] sm:$0xf]
        %v1625 = vld [vmem:[#allocation8 + $0x40] sm:$0xf]
        %v1626 = vld [vmem:[#allocation8 + $0x44] sm:$0xf]
        %v1627 = vld [vmem:[#allocation8 + $0x48] sm:$0xf]
        %v1628 = vld [vmem:[#allocation8 + $0x4c] sm:$0xf]
        %v1629 = vld [vmem:[#allocation8 + $0x50] sm:$0xf]
        %v1630 = vld [vmem:[#allocation8 + $0x54] sm:$0xf]
        %v1631 = vld [vmem:[#allocation8 + $0x58] sm:$0xf]
        %v1632 = vld [vmem:[#allocation8 + $0x5c] sm:$0xf]
        %v1633 = vld [vmem:[#allocation8 + $0x60] sm:$0xf]
        %v1634 = vld [vmem:[#allocation8 + $0x64] sm:$0xf]
        %v1635 = vld [vmem:[#allocation8 + $0x68] sm:$0xf]
        %v1636 = vld [vmem:[#allocation8 + $0x6c] sm:$0xf]
        %v1637 = vld [vmem:[#allocation8 + $0x70] sm:$0xf]
        %v1638 = vld [vmem:[#allocation8 + $0x74] sm:$0xf]
        %v1639 = vld [vmem:[#allocation8 + $0x78] sm:$0xf]
        %v1640 = vld [vmem:[#allocation8 + $0x7c] sm:$0xf]
        %v1641 = vld [vmem:[#allocation8 + $0x80] sm:$0xf]
        %v1642 = vld [vmem:[#allocation8 + $0x84] sm:$0xf]
        %v1643 = vld [vmem:[#allocation8 + $0x88] sm:$0xf]
        %v1644 = vld [vmem:[#allocation8 + $0x8c] sm:$0xf]
        %v1645 = vld [vmem:[#allocation8 + $0x90] sm:$0xf]
        %v1646 = vld [vmem:[#allocation8 + $0x94] sm:$0xf]
        %v1647 = vld [vmem:[#allocation8 + $0x98] sm:$0xf]
        %v1648 = vld [vmem:[#allocation8 + $0x9c] sm:$0xf]
        %v1649 = vld [vmem:[#allocation8 + $0xa0] sm:$0xf]
        %v1650 = vld [vmem:[#allocation8 + $0xa4] sm:$0xf]
        %v1651 = vld [vmem:[#allocation8 + $0xa8] sm:$0xf]
        %v1652 = vld [vmem:[#allocation8 + $0xac] sm:$0xf]
        %v1653 = vld [vmem:[#allocation8 + $0xb0] sm:$0xf]
        %v1654 = vld [vmem:[#allocation8 + $0xb4] sm:$0xf]
        %v1655 = vld [vmem:[#allocation8 + $0xb8] sm:$0xf]
        %v1656 = vld [vmem:[#allocation8 + $0xbc] sm:$0xf]
        %v1657 = vld [vmem:[#allocation8 + $0xc0] sm:$0xf]
        %v1658 = vld [vmem:[#allocation8 + $0xc4] sm:$0xf]
        %v1659 = vld [vmem:[#allocation8 + $0xc8] sm:$0xf]
        %v1660 = vld [vmem:[#allocation8 + $0xcc] sm:$0xf]
        %v1661 = vld [vmem:[#allocation8 + $0xd0] sm:$0xf]
        %v1662 = vld [vmem:[#allocation8 + $0xd4] sm:$0xf]
        %v1663 = vld [vmem:[#allocation8 + $0xd8] sm:$0xf]
        %v1664 = vld [vmem:[#allocation8 + $0xdc] sm:$0xf]
        %v1665 = vld [vmem:[#allocation8 + $0xe0] sm:$0xf]
        %v1666 = vld [vmem:[#allocation8 + $0xe4] sm:$0xf]
        %v1667 = vld [vmem:[#allocation8 + $0xe8] sm:$0xf]
        %v1668 = vld [vmem:[#allocation8 + $0xec] sm:$0xf]
        %v1669 = vld [vmem:[#allocation8 + $0xf0] sm:$0xf]
        %v1670 = vld [vmem:[#allocation8 + $0xf4] sm:$0xf]
        %v1671 = vld [vmem:[#allocation8 + $0xf8] sm:$0xf]
        %v1672 = vld [vmem:[#allocation8 + $0xfc] sm:$0xf]
        %v1673 = vld [vmem:[%s6] sm:$0x1]
        %v1675 = vlaneseq
        %v1676 = vshrl.u32 %v1675, 7
        %v1677 = vsub.s32 0, %v1676
        %v1678 = vrot.slane %v1673, %v1677
        %v1744 = vunpack.c.l.b16 %v1609
        %v1745 = vunpack.c.l.b16 %v1610
        %v1746 = vunpack.c.l.b16 %v1611
        %v1747 = vunpack.c.l.b16 %v1612
        %v1748 = vunpack.c.l.b16 %v1613
        %v1749 = vunpack.c.l.b16 %v1614
        %v1750 = vunpack.c.l.b16 %v1615
        %v1751 = vunpack.c.l.b16 %v1616
        %v1752 = vunpack.c.l.b16 %v1617
        %v1753 = vunpack.c.l.b16 %v1618
        %v1754 = vunpack.c.l.b16 %v1619
        %v1755 = vunpack.c.l.b16 %v1620
        %v1756 = vunpack.c.l.b16 %v1621
        %v1757 = vunpack.c.l.b16 %v1622
        %v1758 = vunpack.c.l.b16 %v1623
        %v1759 = vunpack.c.l.b16 %v1624
        %v1760 = vunpack.c.l.b16 %v1625
        %v1761 = vunpack.c.l.b16 %v1626
        %v1762 = vunpack.c.l.b16 %v1627
        %v1763 = vunpack.c.l.b16 %v1628
        %v1764 = vunpack.c.l.b16 %v1629
        %v1765 = vunpack.c.l.b16 %v1630
        %v1766 = vunpack.c.l.b16 %v1631
        %v1767 = vunpack.c.l.b16 %v1632
        %v1768 = vunpack.c.l.b16 %v1633
        %v1769 = vunpack.c.l.b16 %v1634
        %v1770 = vunpack.c.l.b16 %v1635
        %v1771 = vunpack.c.l.b16 %v1636
        %v1772 = vunpack.c.l.b16 %v1637
        %v1773 = vunpack.c.l.b16 %v1638
        %v1774 = vunpack.c.l.b16 %v1639
        %v1775 = vunpack.c.l.b16 %v1640
        %v1776 = vunpack.c.l.b16 %v1641
        %v1777 = vunpack.c.l.b16 %v1642
        %v1778 = vunpack.c.l.b16 %v1643
        %v1779 = vunpack.c.l.b16 %v1644
        %v1780 = vunpack.c.l.b16 %v1645
        %v1781 = vunpack.c.l.b16 %v1646
        %v1782 = vunpack.c.l.b16 %v1647
        %v1783 = vunpack.c.l.b16 %v1648
        %v1784 = vunpack.c.l.b16 %v1649
        %v1785 = vunpack.c.l.b16 %v1650
        %v1786 = vunpack.c.l.b16 %v1651
        %v1787 = vunpack.c.l.b16 %v1652
        %v1788 = vunpack.c.l.b16 %v1653
        %v1789 = vunpack.c.l.b16 %v1654
        %v1790 = vunpack.c.l.b16 %v1655
        %v1791 = vunpack.c.l.b16 %v1656
        %v1792 = vunpack.c.l.b16 %v1657
        %v1793 = vunpack.c.l.b16 %v1658
        %v1794 = vunpack.c.l.b16 %v1659
        %v1795 = vunpack.c.l.b16 %v1660
        %v1796 = vunpack.c.l.b16 %v1661
        %v1797 = vunpack.c.l.b16 %v1662
        %v1798 = vunpack.c.l.b16 %v1663
        %v1799 = vunpack.c.l.b16 %v1664
        %v1800 = vunpack.c.l.b16 %v1665
        %v1801 = vunpack.c.l.b16 %v1666
        %v1802 = vunpack.c.l.b16 %v1667
        %v1803 = vunpack.c.l.b16 %v1668
        %v1804 = vunpack.c.l.b16 %v1669
        %v1805 = vunpack.c.l.b16 %v1670
        %v1806 = vunpack.c.l.b16 %v1671
        %v1807 = vunpack.c.l.b16 %v1672
        %v1808 = vpack.c.b16 %v1745, %v1744
        %v1809 = vpack.c.b16 %v1747, %v1746
        %v1810 = vpack.c.b16 %v1749, %v1748
        %v1811 = vpack.c.b16 %v1751, %v1750
        %v1812 = vpack.c.b16 %v1753, %v1752
        %v1813 = vpack.c.b16 %v1755, %v1754
        %v1814 = vpack.c.b16 %v1757, %v1756
        %v1815 = vpack.c.b16 %v1759, %v1758
        %v1816 = vpack.c.b16 %v1761, %v1760
        %v1817 = vpack.c.b16 %v1763, %v1762
        %v1818 = vpack.c.b16 %v1765, %v1764
        %v1819 = vpack.c.b16 %v1767, %v1766
        %v1820 = vpack.c.b16 %v1769, %v1768
        %v1821 = vpack.c.b16 %v1771, %v1770
        %v1822 = vpack.c.b16 %v1773, %v1772
        %v1823 = vpack.c.b16 %v1775, %v1774
        %v1824 = vpack.c.b16 %v1777, %v1776
        %v1825 = vpack.c.b16 %v1779, %v1778
        %v1826 = vpack.c.b16 %v1781, %v1780
        %v1827 = vpack.c.b16 %v1783, %v1782
        %v1828 = vpack.c.b16 %v1785, %v1784
        %v1829 = vpack.c.b16 %v1787, %v1786
        %v1830 = vpack.c.b16 %v1789, %v1788
        %v1831 = vpack.c.b16 %v1791, %v1790
        %v1832 = vpack.c.b16 %v1793, %v1792
        %v1833 = vpack.c.b16 %v1795, %v1794
        %v1834 = vpack.c.b16 %v1797, %v1796
        %v1835 = vpack.c.b16 %v1799, %v1798
        %v1836 = vpack.c.b16 %v1801, %v1800
        %v1837 = vpack.c.b16 %v1803, %v1802
        %v1838 = vpack.c.b16 %v1805, %v1804
        %v1839 = vpack.c.b16 %v1807, %v1806
        %1872 = vmatprep.subr.bf16.mxu0 0
        %1873 = vmatpush1.bf16.msra.mxu0 %v1808
        %1874 = vmatprep.subr.bf16.mxu0 0
        %1875 = vmatpush1.bf16.msra.mxu0 %v1809
        %1876 = vmatprep.subr.bf16.mxu0 0
        %1877 = vmatpush1.bf16.msra.mxu0 %v1810
        %1878 = vmatprep.subr.bf16.mxu0 0
        %1879 = vmatpush1.bf16.msra.mxu0 %v1811
        %1880 = vmatprep.subr.bf16.mxu0 0
        %1881 = vmatpush1.bf16.msra.mxu0 %v1812
        %1882 = vmatprep.subr.bf16.mxu0 0
        %1883 = vmatpush1.bf16.msra.mxu0 %v1813
        %1884 = vmatprep.subr.bf16.mxu0 0
        %1885 = vmatpush1.bf16.msra.mxu0 %v1814
        %1886 = vmatprep.subr.bf16.mxu0 0
        %1887 = vmatpush1.bf16.msra.mxu0 %v1815
        %1888 = vmatprep.subr.bf16.mxu0 0
        %1889 = vmatpush1.bf16.msra.mxu0 %v1816
        %1890 = vmatprep.subr.bf16.mxu0 0
        %1891 = vmatpush1.bf16.msra.mxu0 %v1817
        %1892 = vmatprep.subr.bf16.mxu0 0
        %1893 = vmatpush1.bf16.msra.mxu0 %v1818
        %1894 = vmatprep.subr.bf16.mxu0 0
        %1895 = vmatpush1.bf16.msra.mxu0 %v1819
        %1896 = vmatprep.subr.bf16.mxu0 0
        %1897 = vmatpush1.bf16.msra.mxu0 %v1820
        %1898 = vmatprep.subr.bf16.mxu0 0
        %1899 = vmatpush1.bf16.msra.mxu0 %v1821
        %1900 = vmatprep.subr.bf16.mxu0 0
        %1901 = vmatpush1.bf16.msra.mxu0 %v1822
        %1902 = vmatprep.subr.bf16.mxu0 0
        %1903 = vmatpush1.bf16.msra.mxu0 %v1823
        %1904 = vmatprep.mubr.bf16.mxu0 %v1606
        %1905 = vmatmul.mubr.bf16.gmra.mrb[0].mxu0 %v1605
        %v1906 = vpop.f32.mrb[0].mxu0
        %v1907 = vadd.f32 %v1678, %v1906
        %v1908 = vpop.f32.mrb[0].mxu0
        %v1909 = vpop.f32.mrb[0].mxu0
        %v1910 = vadd.f32 %v1678, %v1909
        %v1911 = vpop.f32.mrb[0].mxu0
        %1912 = vdwg.mxu0
        %1913 = vmatprep.subr.bf16.mxu0 0
        %1914 = vmatpush1.bf16.msra.mxu0 %v1824
        %1915 = vmatprep.subr.bf16.mxu0 0
        %1916 = vmatpush1.bf16.msra.mxu0 %v1825
        %1917 = vmatprep.subr.bf16.mxu0 0
        %1918 = vmatpush1.bf16.msra.mxu0 %v1826
        %1919 = vmatprep.subr.bf16.mxu0 0
        %1920 = vmatpush1.bf16.msra.mxu0 %v1827
        %1921 = vmatprep.subr.bf16.mxu0 0
        %1922 = vmatpush1.bf16.msra.mxu0 %v1828
        %1923 = vmatprep.subr.bf16.mxu0 0
        %1924 = vmatpush1.bf16.msra.mxu0 %v1829
        %1925 = vmatprep.subr.bf16.mxu0 0
        %1926 = vmatpush1.bf16.msra.mxu0 %v1830
        %1927 = vmatprep.subr.bf16.mxu0 0
        %1928 = vmatpush1.bf16.msra.mxu0 %v1831
        %1929 = vmatprep.subr.bf16.mxu0 0
        %1930 = vmatpush1.bf16.msra.mxu0 %v1832
        %1931 = vmatprep.subr.bf16.mxu0 0
        %1932 = vmatpush1.bf16.msra.mxu0 %v1833
        %1933 = vmatprep.subr.bf16.mxu0 0
        %1934 = vmatpush1.bf16.msra.mxu0 %v1834
        %1935 = vmatprep.subr.bf16.mxu0 0
        %1936 = vmatpush1.bf16.msra.mxu0 %v1835
        %1937 = vmatprep.subr.bf16.mxu0 0
        %1938 = vmatpush1.bf16.msra.mxu0 %v1836
        %1939 = vmatprep.subr.bf16.mxu0 0
        %1940 = vmatpush1.bf16.msra.mxu0 %v1837
        %1941 = vmatprep.subr.bf16.mxu0 0
        %1942 = vmatpush1.bf16.msra.mxu0 %v1838
        %1943 = vmatprep.subr.bf16.mxu0 0
        %1944 = vmatpush1.bf16.msra.mxu0 %v1839
        %1945 = vmatprep.mubr.bf16.mxu0 %v1608
        %1946 = vmatmul.mubr.bf16.gmra.mrb[0].mxu0 %v1607
        %v1947 = vpop.f32.mrb[0].mxu0
        %v1948 = vadd.f32 %v1907, %v1947
        %v1949 = vpop.f32.mrb[0].mxu0
        %v1950 = vpop.f32.mrb[0].mxu0
        %v1951 = vadd.f32 %v1910, %v1950
        %v1952 = vpop.f32.mrb[0].mxu0
        %1953 = vdwg.mxu0
        %v1954 = vadd.f32 %v1948, %v342
        %v1955 = vadd.f32 %v1951, %v343
        %1956 = vst [vmem:[%s340] sm:$0xff] %v1954
        %1957 = vst [vmem:[%s340 + $0x8] sm:$0xff] %v1955
        %s1958 = sand.u32 %s186, 1
        %s1959 = scalar_lea.sflag [#allocation4], %s1958
        %s1960 = sand.u32 %s186, 1
        %s1961 = smul.addr %s1960, 16
        %s1962 = scalar_lea.vmem [#allocation10], %s1961
        // Predicated region
        $region65: #{tpu_custom_call.1} parent=47 // pred_check
          %p1963 = pneg %p196
        $region66: #{tpu_custom_call.1} parent=47 // pred_check_branch
          %1965 = sbr.rel (%p1963) target = $region68
        $region67: #{tpu_custom_call.1} parent=47 // pred_region
          %s1967 = ssub.s32 256, 256
          %1968 = vsyncadd %s1959, %s1967
          %s1969 = smul.addr %s26, 2
          %s1970 = smul.addr %s1969, 128
          %s1971 = scalar_lea.hbm %s7, %s1970
          %s1972 = sshll.u32 %s1962, 4
          %s1973 = int_to_ptr.vmem [resolvable:$true] %s1972
          %1978 = dma.vmem_to_hbm [thread:$0]  %s1973, 256, %s1971, %s1959, 128, 128, 8
        $region68: #{tpu_custom_call.1} parent=47 // pred_fallthru
          _
      $region48: #{tpu_custom_call.1} parent=5 // pred_fallthru
        _
      %p1979 = scmp.le.s32.totalorder 2, %s21
      // Predicated region
      $region69: #{tpu_custom_call.1} parent=5 // pred_check
        %p1980 = pneg %p1979
      $region70: #{tpu_custom_call.1} parent=5 // pred_check_branch
        %1982 = sbr.rel (%p1980) target = $region72
      $region71: #{tpu_custom_call.1} parent=5 // pred_region
        %s1983 = ssub.s32 %s21, 2
        // Predicated region
        $region73: #{tpu_custom_call.1} parent=71 // pred_check
          %p1984 = pneg %p202
        $region74: #{tpu_custom_call.1} parent=71 // pred_check_branch
          %1986 = sbr.rel (%p1984) target = $region76
        $region75: #{tpu_custom_call.1} parent=71 // pred_region
          %s1987 = sand.u32 %s187, 1
          %s1988 = scalar_lea.sflag [#allocation4], %s1987
          %s1989 = sand.u32 %s187, 1
          %s1990 = smul.addr %s1989, 16
          %s1991 = scalar_lea.vmem [#allocation10], %s1990
          %1992 = dma.done %s1988, 256
        $region76: #{tpu_custom_call.1} parent=71 // pred_fallthru
          _
      $region72: #{tpu_custom_call.1} parent=5 // pred_fallthru
        _
    $region6: #{tpu_custom_call.1} parent=1 // loop_footer
      %s25 = sadd.s32 1, %s21
    $region7: #{tpu_custom_call.1} parent=1 // loop_footer_branch
      %20 = sbr.rel target = $region3
    $region8: #{tpu_custom_call.1} parent=1 // loop_exit
      _
    %1993 = vsyncpa [#allocation3], 1
    %s1994 = scalar_lea.sflag [#allocation3], 1
    %1995 = vsyncpa %s1994, 1
    %1996 = vsyncpa [#allocation6], 1
    %1997 = vsyncpa [#allocation9], 1
    %1998 = vsyncpa [#allocation4], 1
    %s1999 = scalar_lea.sflag [#allocation4], 1
    %2000 = vsyncpa %s1999, 1

</llo_original>
